<compile_context>
chip_gen: v7x
topology: tpu7x:2x2x1
jax: 0.10.0
libtpu: 0.0.40
codegen_flags: <defaults>
</compile_context>

<pallas_src>
import functools

import jax
import jax.numpy as jnp
from jax import lax
from jax.experimental import pallas as pl
from jax.experimental.pallas import tpu as pltpu

EPS = 1e-5  # nn.BatchNorm1d default eps


def _round_up(x, m):
    return ((x + m - 1) // m) * m


def _make_stack_cnn_kernel(layer_num, kernel_size, padding, LP, TB, C_in, CP, GP,
                           tap_dtype):
    M = TB * LP

    def kernel(*refs):
        x_ref = refs[0]
        mask_ref = refs[1]
        param_refs = refs[2:2 + 3 * layer_num]
        o_ref = refs[2 + 3 * layer_num]
        buf_ref = refs[3 + 3 * layer_num]          # (GP + M + GP, CP) tap scratch

        # Outer guard strips of the tap buffer: only ever read while producing guard
        # output rows (whose results are discarded), zeroed every step (cheap and
        # megacore-safe -- no cross-grid-step state is relied upon).
        zero_strip = jnp.zeros((GP, CP), tap_dtype)
        buf_ref[pl.ds(0, GP), pl.ds(0, CP)] = zero_strip
        buf_ref[pl.ds(GP + M, GP), pl.ds(0, CP)] = zero_strip

        # (M, 1) guard-row mask (1.0 on real rows, 0.0 on guard rows), hoisted.
        mask = mask_ref[...]

        # Layer-0 input; its guard rows are already zero from the wrapper layout.
        buf_ref[pl.ds(GP, M), pl.ds(0, C_in)] = x_ref[0].astype(tap_dtype)

        cw = C_in                                   # channel width of current taps
        y = None
        for li in range(layer_num):
            w_ref, scale_ref, bias_ref = param_refs[3 * li: 3 * li + 3]

            # k shifted taps read straight out of the scratch at static row offsets;
            # each tap gets its own accumulated matmul (no im2col lane concat).
            # NOTE: for a strict-f32 check at large sizes, plumb
            # precision=jax.lax.Precision.HIGHEST into this dot.
            acc = None
            for dk in range(kernel_size):
                tap = buf_ref[pl.ds(GP + dk - padding, M), pl.ds(0, cw)]
                part = jnp.dot(tap, w_ref[dk], preferred_element_type=jnp.float32)
                acc = part if acc is None else acc + part

            # Folded conv-bias + eval-mode BatchNorm + ReLU (f32), then re-zero the
            # guard rows once so the next layer's taps see correct zero padding.
            y = jnp.maximum(acc * scale_ref[...] + bias_ref[...], 0.0) * mask

            if li + 1 < layer_num:
                buf_ref[pl.ds(GP, M), pl.ds(0, CP)] = y.astype(tap_dtype)
                cw = CP

        # AdaptiveMaxPool1d(1): max over the LP rows of each element (guard rows are 0
        # and ReLU outputs are >= 0 so they never win).  LP % 8 == 0 keeps the reshape
        # tile-aligned; the (TB, CP) store is fully lane-dense.
        o_ref[0] = jnp.max(y.reshape(TB, LP, CP), axis=1)

    return kernel


@functools.partial(jax.jit,
                   static_argnames=("kernel_size", "padding", "block_batch",
                                    "tap_dtype"))
def stack_cnn_forward(x_ncl, params, *, kernel_size, padding, block_batch=None,
                      tap_dtype=jnp.bfloat16):
    """Fused StackCNN forward.

    x_ncl:  (N, C_in, L) float32 in PyTorch NCL layout.
    params: list of per-layer PyTorch-shaped tensors
            (w (C_out, C_in_l, k), b, gamma, beta, running_mean, running_var).
    Returns (N, C_out) float32  ==  StackCNN(x)  (eval-mode BatchNorm).
    """
    assert 2 * padding == kernel_size - 1, "kernel assumes stride=1 'same' conv"
    N, C_in, L = x_ncl.shape
    layer_num = len(params)
    C_out = params[0][0].shape[0]

    CP = _round_up(C_out, 128)            # lane-dense channel width (128 = v5e target)
    LP = _round_up(L + 2 * padding, 8)    # guard-padded rows per element (tile-aligned)
    GP = max(8, _round_up(padding, 8))    # outer guard strip of the tap scratch

    # Batch block: target ~2048 flattened rows per grid step (amortizes the ~0.35us
    # per-step overhead), tunable via block_batch; keep G >= 2 so both v7x TCs get
    # work.  Working set per step stays far under v7x's 64 MiB VMEM at these sizes.
    if block_batch is None:
        block_batch = max(1, 2048 // LP)
        block_batch = min(block_batch, N)
        if N > 1:
            block_batch = min(block_batch, pl.cdiv(N, 2))
    TB = max(1, block_batch)
    G = pl.cdiv(N, TB)
    N_pad = G * TB
    M = TB * LP

    # NCL -> NLC, pad batch to G*TB, insert per-element zero guard rows, flatten each
    # block to (M, C_in).  Under jit this fuses into one relayout of the small input;
    # at production sizes it can move in-kernel via a (TB, C_in, L) BlockSpec.
    x_nlc = jnp.transpose(x_ncl.astype(jnp.float32), (0, 2, 1))
    x_pad = jnp.pad(x_nlc, ((0, N_pad - N), (padding, LP - L - padding), (0, 0)))
    x_flat = x_pad.reshape(G, M, C_in)

    # (M, 1) guard-row mask: 1.0 on the L real rows of each element, 0.0 on guards.
    pos = jnp.arange(LP)
    elem_mask = ((pos >= padding) & (pos < padding + L)).astype(jnp.float32)
    row_mask = jnp.tile(elem_mask, (TB,)).reshape(M, 1)

    # Fold conv bias + eval-mode BN into per-channel scale/bias; split the conv weight
    # into k per-tap matrices; zero-pad channels to CP (lane-dense MXU N / stores).
    const3 = lambda g: (0, 0, 0)
    const2 = lambda g: (0, 0)
    in_specs = [
        pl.BlockSpec((1, M, C_in), lambda g: (g, 0, 0)),
        pl.BlockSpec((M, 1), const2, pipeline_mode=pl.Buffered(1)),
    ]
    flat_params = []
    for li, (w, b, gamma, beta, mean, var) in enumerate(params):
        scale = gamma * lax.rsqrt(var + EPS)
        bias = (b - mean) * scale + beta
        w_taps = jnp.transpose(w, (2, 1, 0))                      # (k, C_in_l, C_out)
        row_pad = 0 if li == 0 else CP - w_taps.shape[1]
        w_taps = jnp.pad(w_taps, ((0, 0), (0, row_pad), (0, CP - C_out)))
        w_taps = w_taps.astype(tap_dtype)
        scale_p = jnp.pad(scale, (0, CP - C_out)).reshape(1, CP).astype(jnp.float32)
        bias_p = jnp.pad(bias, (0, CP - C_out)).reshape(1, CP).astype(jnp.float32)
        # Constant across the grid -> single-buffered (no pointless VMEM duplication).
        in_specs.append(pl.BlockSpec(w_taps.shape, const3,
                                     pipeline_mode=pl.Buffered(1)))
        in_specs.append(pl.BlockSpec(scale_p.shape, const2,
                                     pipeline_mode=pl.Buffered(1)))
        in_specs.append(pl.BlockSpec(bias_p.shape, const2,
                                     pipeline_mode=pl.Buffered(1)))
        flat_params += [w_taps, scale_p, bias_p]

    kernel = _make_stack_cnn_kernel(layer_num, kernel_size, padding, LP, TB,
                                    C_in, CP, GP, tap_dtype)

    out = pl.pallas_call(
        kernel,
        out_shape=jax.ShapeDtypeStruct((G, TB, CP), jnp.float32),
        grid=(G,),
        in_specs=in_specs,
        out_specs=pl.BlockSpec((1, TB, CP), lambda g: (g, 0, 0)),
        scratch_shapes=[pltpu.VMEM((GP + M + GP, CP), tap_dtype)],
        compiler_params=pltpu.CompilerParams(
            dimension_semantics=("parallel",),
            # explicit limit keeps bigger-TB configs portable to v7x's 64 MiB VMEM
            vmem_limit_bytes=32 * 1024 * 1024),
    )(x_flat, row_mask, *flat_params)

    return out.reshape(N_pad, CP)[:N, :C_out]      # == pooled .squeeze(-1)


def ref_forward(x_ncl, params, *, padding):
    """Pure-JAX reference mirroring the PyTorch module (eval-mode BatchNorm)."""
    y = x_ncl
    for (w, b, gamma, beta, mean, var) in params:
        y = lax.conv_general_dilated(
            y, w, window_strides=(1,), padding=[(padding, padding)],
            dimension_numbers=("NCH", "OIH", "NCH"),
            precision=lax.Precision.HIGHEST)
        y = y + b[None, :, None]
        y = (y - mean[None, :, None]) / jnp.sqrt(var[None, :, None] + EPS)
        y = y * gamma[None, :, None] + beta[None, :, None]
        y = jnp.maximum(y, 0.0)
    return jnp.max(y, axis=-1)                     # AdaptiveMaxPool1d(1) + squeeze(-1)


def make_params(key, layer_num, in_channels, out_channels, kernel_size):
    """Deterministic synthetic PyTorch-shaped parameters."""
    params = []
    cin = in_channels
    for _ in range(layer_num):
        key, kw, kb, kg, kbeta, km, kv = jax.random.split(key, 7)
        w = 0.1 * jax.random.normal(kw, (out_channels, cin, kernel_size), jnp.float32)
        b = 0.1 * jax.random.normal(kb, (out_channels,), jnp.float32)
        gamma = 1.0 + 0.1 * jax.random.normal(kg, (out_channels,), jnp.float32)
        beta = 0.1 * jax.random.normal(kbeta, (out_channels,), jnp.float32)
        mean = 0.1 * jax.random.normal(km, (out_channels,), jnp.float32)
        var = 1.0 + 0.1 * jnp.abs(jax.random.normal(kv, (out_channels,), jnp.float32))
        params.append((w, b, gamma, beta, mean, var))
        cin = out_channels
    return params


if __name__ == "__main__":
    # StackCNN(layer_num=3, in_channels=4, out_channels=32, kernel_size=3, padding=1)
    N, C_IN, C_OUT, L = 2, 4, 32, 16
    LAYER_NUM, KSIZE, PAD = 3, 3, 1

    key = jax.random.PRNGKey(0)
    key, kx = jax.random.split(key)
    x = jax.random.normal(kx, (N, C_IN, L), jnp.float32)    # PyTorch NCL input

    params = make_params(key, LAYER_NUM, C_IN, C_OUT, KSIZE)
    ref = ref_forward(x, params, padding=PAD)

    # f32 tap path (use on v5e / for stricter numerics).  Tolerance kept moderate
    # because TPU f32 matmul default precision can be reduced unless HIGHEST is
    # plumbed into the in-kernel dot (typically matches to ~1e-5).
    out_f32 = stack_cnn_forward(x, params, kernel_size=KSIZE, padding=PAD,
                                tap_dtype=jnp.float32)
    out_f32 = jax.block_until_ready(out_f32)
    assert out_f32.shape == (N, C_OUT), out_f32.shape
    err32 = float(jnp.max(jnp.abs(out_f32 - ref)))
    assert jnp.allclose(out_f32, ref, atol=2e-2, rtol=2e-2), err32

    # bf16 tap path (v6e/v7x throughput path): looser tolerance for bf16 operands.
    out_bf16 = stack_cnn_forward(x, params, kernel_size=KSIZE, padding=PAD)
    out_bf16 = jax.block_until_ready(out_bf16)
    assert out_bf16.shape == (N, C_OUT), out_bf16.shape
    err16 = float(jnp.max(jnp.abs(out_bf16 - ref)))
    assert jnp.allclose(out_bf16, ref, atol=5e-2, rtol=5e-2), err16

    print("KERNEL_OK")
</pallas_src>

<mosaic_0001>
module attributes {stable_mosaic.version = 11 : i64} {
  func.func @kernel(%arg0: i32, %arg1: memref<1x24x4xf32, #tpu.memory_space<vmem>>, %arg2: memref<24x1xf32, #tpu.memory_space<vmem>>, %arg3: memref<3x4x128xf32, #tpu.memory_space<vmem>>, %arg4: memref<1x128xf32, #tpu.memory_space<vmem>>, %arg5: memref<1x128xf32, #tpu.memory_space<vmem>>, %arg6: memref<3x128x128xf32, #tpu.memory_space<vmem>>, %arg7: memref<1x128xf32, #tpu.memory_space<vmem>>, %arg8: memref<1x128xf32, #tpu.memory_space<vmem>>, %arg9: memref<3x128x128xf32, #tpu.memory_space<vmem>>, %arg10: memref<1x128xf32, #tpu.memory_space<vmem>>, %arg11: memref<1x128xf32, #tpu.memory_space<vmem>>, %arg12: memref<1x1x128xf32, #tpu.memory_space<vmem>>, %arg13: memref<40x128xf32, #tpu.memory_space<vmem>>) attributes {dimension_semantics = [#tpu.dimension_semantics<parallel>], iteration_bounds = array<i64: 2>, scalar_prefetch = 0 : i64, scratch_operands = 1 : i64, tpu.core_type = #tpu.core_type<tc>, window_params = [{transform_indices = @transform_0, window_bounds = array<i64: 1, 24, 4>}, {pipeline_mode = #tpu.pipeline_mode<synchronous>, transform_indices = @transform_1, window_bounds = array<i64: 24, 1>}, {pipeline_mode = #tpu.pipeline_mode<synchronous>, transform_indices = @transform_2, window_bounds = array<i64: 3, 4, 128>}, {pipeline_mode = #tpu.pipeline_mode<synchronous>, transform_indices = @transform_3, window_bounds = array<i64: 1, 128>}, {pipeline_mode = #tpu.pipeline_mode<synchronous>, transform_indices = @transform_4, window_bounds = array<i64: 1, 128>}, {pipeline_mode = #tpu.pipeline_mode<synchronous>, transform_indices = @transform_5, window_bounds = array<i64: 3, 128, 128>}, {pipeline_mode = #tpu.pipeline_mode<synchronous>, transform_indices = @transform_6, window_bounds = array<i64: 1, 128>}, {pipeline_mode = #tpu.pipeline_mode<synchronous>, transform_indices = @transform_7, window_bounds = array<i64: 1, 128>}, {pipeline_mode = #tpu.pipeline_mode<synchronous>, transform_indices = @transform_8, window_bounds = array<i64: 3, 128, 128>}, {pipeline_mode = #tpu.pipeline_mode<synchronous>, transform_indices = @transform_9, window_bounds = array<i64: 1, 128>}, {pipeline_mode = #tpu.pipeline_mode<synchronous>, transform_indices = @transform_10, window_bounds = array<i64: 1, 128>}, {transform_indices = @transform_11, window_bounds = array<i64: 1, 1, 128>}]} {
    %cst = arith.constant 0.000000e+00 : f32
    %0 = vector.broadcast %cst : f32 to vector<8x128xf32>
    %c0 = arith.constant 0 : index
    %c0_0 = arith.constant 0 : index
    %1 = vector.load %arg13[%c0, %c0_0] : memref<40x128xf32, #tpu.memory_space<vmem>>, vector<8x128xf32>
    tpu.vector_store %arg13[%c0, %c0_0], %0 {strides = array<i32>} : memref<40x128xf32, #tpu.memory_space<vmem>>, vector<8x128xf32>,
    %c32 = arith.constant 32 : index
    %c0_1 = arith.constant 0 : index
    %2 = vector.load %arg13[%c32, %c0_1] : memref<40x128xf32, #tpu.memory_space<vmem>>, vector<8x128xf32>
    tpu.vector_store %arg13[%c32, %c0_1], %0 {strides = array<i32>} : memref<40x128xf32, #tpu.memory_space<vmem>>, vector<8x128xf32>,
    %c0_2 = arith.constant 0 : index
    %c0_3 = arith.constant 0 : index
    %3 = vector.load %arg2[%c0_2, %c0_3] : memref<24x1xf32, #tpu.memory_space<vmem>>, vector<24x1xf32>
    %c0_4 = arith.constant 0 : index
    %c0_5 = arith.constant 0 : index
    %c0_6 = arith.constant 0 : index
    %4 = vector.load %arg1[%c0_4, %c0_5, %c0_6] : memref<1x24x4xf32, #tpu.memory_space<vmem>>, vector<1x24x4xf32>
    %5 = vector.shape_cast %4 : vector<1x24x4xf32> to vector<24x4xf32>
    %c8 = arith.constant 8 : index
    %c0_7 = arith.constant 0 : index
    %6 = vector.load %arg13[%c8, %c0_7] : memref<40x128xf32, #tpu.memory_space<vmem>>, vector<24x4xf32>
    tpu.vector_store %arg13[%c8, %c0_7], %5 {strides = array<i32>} : memref<40x128xf32, #tpu.memory_space<vmem>>, vector<24x4xf32>,
    %c7 = arith.constant 7 : index
    %c0_8 = arith.constant 0 : index
    %7 = vector.load %arg13[%c7, %c0_8] : memref<40x128xf32, #tpu.memory_space<vmem>>, vector<24x4xf32>
    %c0_9 = arith.constant 0 : index
    %c0_10 = arith.constant 0 : index
    %c0_11 = arith.constant 0 : index
    %8 = vector.load %arg3[%c0_9, %c0_10, %c0_11] : memref<3x4x128xf32, #tpu.memory_space<vmem>>, vector<1x4x128xf32>
    %9 = vector.shape_cast %8 : vector<1x4x128xf32> to vector<4x128xf32>
    %cst_12 = arith.constant dense<0.000000e+00> : vector<24x128xf32>
    %10 = tpu.matmul %7, %9, %cst_12 {dimension_numbers = #tpu.dot_dimension_numbers<[1], [0], [0], [1], [0, 0, 1, 1], [], []>} : vector<24x4xf32>, vector<4x128xf32>, vector<24x128xf32> -> vector<24x128xf32>
    %c8_13 = arith.constant 8 : index
    %c0_14 = arith.constant 0 : index
    %11 = vector.load %arg13[%c8_13, %c0_14] : memref<40x128xf32, #tpu.memory_space<vmem>>, vector<24x4xf32>
    %c1 = arith.constant 1 : index
    %c0_15 = arith.constant 0 : index
    %c0_16 = arith.constant 0 : index
    %12 = vector.load %arg3[%c1, %c0_15, %c0_16] : memref<3x4x128xf32, #tpu.memory_space<vmem>>, vector<1x4x128xf32>
    %13 = vector.shape_cast %12 : vector<1x4x128xf32> to vector<4x128xf32>
    %cst_17 = arith.constant dense<0.000000e+00> : vector<24x128xf32>
    %14 = tpu.matmul %11, %13, %cst_17 {dimension_numbers = #tpu.dot_dimension_numbers<[1], [0], [0], [1], [0, 0, 1, 1], [], []>} : vector<24x4xf32>, vector<4x128xf32>, vector<24x128xf32> -> vector<24x128xf32>
    %15 = arith.addf %10, %14 : vector<24x128xf32>
    %c9 = arith.constant 9 : index
    %c0_18 = arith.constant 0 : index
    %16 = vector.load %arg13[%c9, %c0_18] : memref<40x128xf32, #tpu.memory_space<vmem>>, vector<24x4xf32>
    %c2 = arith.constant 2 : index
    %c0_19 = arith.constant 0 : index
    %c0_20 = arith.constant 0 : index
    %17 = vector.load %arg3[%c2, %c0_19, %c0_20] : memref<3x4x128xf32, #tpu.memory_space<vmem>>, vector<1x4x128xf32>
    %18 = vector.shape_cast %17 : vector<1x4x128xf32> to vector<4x128xf32>
    %cst_21 = arith.constant dense<0.000000e+00> : vector<24x128xf32>
    %19 = tpu.matmul %16, %18, %cst_21 {dimension_numbers = #tpu.dot_dimension_numbers<[1], [0], [0], [1], [0, 0, 1, 1], [], []>} : vector<24x4xf32>, vector<4x128xf32>, vector<24x128xf32> -> vector<24x128xf32>
    %20 = arith.addf %15, %19 : vector<24x128xf32>
    %c0_22 = arith.constant 0 : index
    %c0_23 = arith.constant 0 : index
    %21 = vector.load %arg4[%c0_22, %c0_23] : memref<1x128xf32, #tpu.memory_space<vmem>>, vector<1x128xf32>
    %22 = vector.broadcast %21 : vector<1x128xf32> to vector<24x128xf32>
    %23 = arith.mulf %20, %22 : vector<24x128xf32>
    %c0_24 = arith.constant 0 : index
    %c0_25 = arith.constant 0 : index
    %24 = vector.load %arg5[%c0_24, %c0_25] : memref<1x128xf32, #tpu.memory_space<vmem>>, vector<1x128xf32>
    %25 = vector.broadcast %24 : vector<1x128xf32> to vector<24x128xf32>
    %26 = arith.addf %23, %25 : vector<24x128xf32>
    %cst_26 = arith.constant 0.000000e+00 : f32
    %27 = vector.broadcast %cst_26 : f32 to vector<24x128xf32>
    %28 = arith.maximumf %26, %27 : vector<24x128xf32>
    %29 = vector.broadcast %3 : vector<24x1xf32> to vector<24x128xf32>
    %30 = arith.mulf %28, %29 : vector<24x128xf32>
    %c8_27 = arith.constant 8 : index
    %c0_28 = arith.constant 0 : index
    %31 = vector.load %arg13[%c8_27, %c0_28] : memref<40x128xf32, #tpu.memory_space<vmem>>, vector<24x128xf32>
    tpu.vector_store %arg13[%c8_27, %c0_28], %30 {strides = array<i32>} : memref<40x128xf32, #tpu.memory_space<vmem>>, vector<24x128xf32>,
    %c7_29 = arith.constant 7 : index
    %c0_30 = arith.constant 0 : index
    %32 = vector.load %arg13[%c7_29, %c0_30] : memref<40x128xf32, #tpu.memory_space<vmem>>, vector<24x128xf32>
    %c0_31 = arith.constant 0 : index
    %c0_32 = arith.constant 0 : index
    %c0_33 = arith.constant 0 : index
    %33 = vector.load %arg6[%c0_31, %c0_32, %c0_33] : memref<3x128x128xf32, #tpu.memory_space<vmem>>, vector<1x128x128xf32>
    %34 = vector.shape_cast %33 : vector<1x128x128xf32> to vector<128x128xf32>
    %cst_34 = arith.constant dense<0.000000e+00> : vector<24x128xf32>
    %35 = tpu.matmul %32, %34, %cst_34 {dimension_numbers = #tpu.dot_dimension_numbers<[1], [0], [0], [1], [0, 0, 1, 1], [], []>} : vector<24x128xf32>, vector<128x128xf32>, vector<24x128xf32> -> vector<24x128xf32>
    %c8_35 = arith.constant 8 : index
    %c0_36 = arith.constant 0 : index
    %36 = vector.load %arg13[%c8_35, %c0_36] : memref<40x128xf32, #tpu.memory_space<vmem>>, vector<24x128xf32>
    %c1_37 = arith.constant 1 : index
    %c0_38 = arith.constant 0 : index
    %c0_39 = arith.constant 0 : index
    %37 = vector.load %arg6[%c1_37, %c0_38, %c0_39] : memref<3x128x128xf32, #tpu.memory_space<vmem>>, vector<1x128x128xf32>
    %38 = vector.shape_cast %37 : vector<1x128x128xf32> to vector<128x128xf32>
    %cst_40 = arith.constant dense<0.000000e+00> : vector<24x128xf32>
    %39 = tpu.matmul %36, %38, %cst_40 {dimension_numbers = #tpu.dot_dimension_numbers<[1], [0], [0], [1], [0, 0, 1, 1], [], []>} : vector<24x128xf32>, vector<128x128xf32>, vector<24x128xf32> -> vector<24x128xf32>
    %40 = arith.addf %35, %39 : vector<24x128xf32>
    %c9_41 = arith.constant 9 : index
    %c0_42 = arith.constant 0 : index
    %41 = vector.load %arg13[%c9_41, %c0_42] : memref<40x128xf32, #tpu.memory_space<vmem>>, vector<24x128xf32>
    %c2_43 = arith.constant 2 : index
    %c0_44 = arith.constant 0 : index
    %c0_45 = arith.constant 0 : index
    %42 = vector.load %arg6[%c2_43, %c0_44, %c0_45] : memref<3x128x128xf32, #tpu.memory_space<vmem>>, vector<1x128x128xf32>
    %43 = vector.shape_cast %42 : vector<1x128x128xf32> to vector<128x128xf32>
    %cst_46 = arith.constant dense<0.000000e+00> : vector<24x128xf32>
    %44 = tpu.matmul %41, %43, %cst_46 {dimension_numbers = #tpu.dot_dimension_numbers<[1], [0], [0], [1], [0, 0, 1, 1], [], []>} : vector<24x128xf32>, vector<128x128xf32>, vector<24x128xf32> -> vector<24x128xf32>
    %45 = arith.addf %40, %44 : vector<24x128xf32>
    %c0_47 = arith.constant 0 : index
    %c0_48 = arith.constant 0 : index
    %46 = vector.load %arg7[%c0_47, %c0_48] : memref<1x128xf32, #tpu.memory_space<vmem>>, vector<1x128xf32>
    %47 = vector.broadcast %46 : vector<1x128xf32> to vector<24x128xf32>
    %48 = arith.mulf %45, %47 : vector<24x128xf32>
    %c0_49 = arith.constant 0 : index
    %c0_50 = arith.constant 0 : index
    %49 = vector.load %arg8[%c0_49, %c0_50] : memref<1x128xf32, #tpu.memory_space<vmem>>, vector<1x128xf32>
    %50 = vector.broadcast %49 : vector<1x128xf32> to vector<24x128xf32>
    %51 = arith.addf %48, %50 : vector<24x128xf32>
    %cst_51 = arith.constant 0.000000e+00 : f32
    %52 = vector.broadcast %cst_51 : f32 to vector<24x128xf32>
    %53 = arith.maximumf %51, %52 : vector<24x128xf32>
    %54 = vector.broadcast %3 : vector<24x1xf32> to vector<24x128xf32>
    %55 = arith.mulf %53, %54 : vector<24x128xf32>
    %c8_52 = arith.constant 8 : index
    %c0_53 = arith.constant 0 : index
    %56 = vector.load %arg13[%c8_52, %c0_53] : memref<40x128xf32, #tpu.memory_space<vmem>>, vector<24x128xf32>
    tpu.vector_store %arg13[%c8_52, %c0_53], %55 {strides = array<i32>} : memref<40x128xf32, #tpu.memory_space<vmem>>, vector<24x128xf32>,
    %c7_54 = arith.constant 7 : index
    %c0_55 = arith.constant 0 : index
    %57 = vector.load %arg13[%c7_54, %c0_55] : memref<40x128xf32, #tpu.memory_space<vmem>>, vector<24x128xf32>
    %c0_56 = arith.constant 0 : index
    %c0_57 = arith.constant 0 : index
    %c0_58 = arith.constant 0 : index
    %58 = vector.load %arg9[%c0_56, %c0_57, %c0_58] : memref<3x128x128xf32, #tpu.memory_space<vmem>>, vector<1x128x128xf32>
    %59 = vector.shape_cast %58 : vector<1x128x128xf32> to vector<128x128xf32>
    %cst_59 = arith.constant dense<0.000000e+00> : vector<24x128xf32>
    %60 = tpu.matmul %57, %59, %cst_59 {dimension_numbers = #tpu.dot_dimension_numbers<[1], [0], [0], [1], [0, 0, 1, 1], [], []>} : vector<24x128xf32>, vector<128x128xf32>, vector<24x128xf32> -> vector<24x128xf32>
    %c8_60 = arith.constant 8 : index
    %c0_61 = arith.constant 0 : index
    %61 = vector.load %arg13[%c8_60, %c0_61] : memref<40x128xf32, #tpu.memory_space<vmem>>, vector<24x128xf32>
    %c1_62 = arith.constant 1 : index
    %c0_63 = arith.constant 0 : index
    %c0_64 = arith.constant 0 : index
    %62 = vector.load %arg9[%c1_62, %c0_63, %c0_64] : memref<3x128x128xf32, #tpu.memory_space<vmem>>, vector<1x128x128xf32>
    %63 = vector.shape_cast %62 : vector<1x128x128xf32> to vector<128x128xf32>
    %cst_65 = arith.constant dense<0.000000e+00> : vector<24x128xf32>
    %64 = tpu.matmul %61, %63, %cst_65 {dimension_numbers = #tpu.dot_dimension_numbers<[1], [0], [0], [1], [0, 0, 1, 1], [], []>} : vector<24x128xf32>, vector<128x128xf32>, vector<24x128xf32> -> vector<24x128xf32>
    %65 = arith.addf %60, %64 : vector<24x128xf32>
    %c9_66 = arith.constant 9 : index
    %c0_67 = arith.constant 0 : index
    %66 = vector.load %arg13[%c9_66, %c0_67] : memref<40x128xf32, #tpu.memory_space<vmem>>, vector<24x128xf32>
    %c2_68 = arith.constant 2 : index
    %c0_69 = arith.constant 0 : index
    %c0_70 = arith.constant 0 : index
    %67 = vector.load %arg9[%c2_68, %c0_69, %c0_70] : memref<3x128x128xf32, #tpu.memory_space<vmem>>, vector<1x128x128xf32>
    %68 = vector.shape_cast %67 : vector<1x128x128xf32> to vector<128x128xf32>
    %cst_71 = arith.constant dense<0.000000e+00> : vector<24x128xf32>
    %69 = tpu.matmul %66, %68, %cst_71 {dimension_numbers = #tpu.dot_dimension_numbers<[1], [0], [0], [1], [0, 0, 1, 1], [], []>} : vector<24x128xf32>, vector<128x128xf32>, vector<24x128xf32> -> vector<24x128xf32>
    %70 = arith.addf %65, %69 : vector<24x128xf32>
    %c0_72 = arith.constant 0 : index
    %c0_73 = arith.constant 0 : index
    %71 = vector.load %arg10[%c0_72, %c0_73] : memref<1x128xf32, #tpu.memory_space<vmem>>, vector<1x128xf32>
    %72 = vector.broadcast %71 : vector<1x128xf32> to vector<24x128xf32>
    %73 = arith.mulf %70, %72 : vector<24x128xf32>
    %c0_74 = arith.constant 0 : index
    %c0_75 = arith.constant 0 : index
    %74 = vector.load %arg11[%c0_74, %c0_75] : memref<1x128xf32, #tpu.memory_space<vmem>>, vector<1x128xf32>
    %75 = vector.broadcast %74 : vector<1x128xf32> to vector<24x128xf32>
    %76 = arith.addf %73, %75 : vector<24x128xf32>
    %cst_76 = arith.constant 0.000000e+00 : f32
    %77 = vector.broadcast %cst_76 : f32 to vector<24x128xf32>
    %78 = arith.maximumf %76, %77 : vector<24x128xf32>
    %79 = vector.broadcast %3 : vector<24x1xf32> to vector<24x128xf32>
    %80 = arith.mulf %78, %79 : vector<24x128xf32>
    %81 = vector.shape_cast %80 : vector<24x128xf32> to vector<1x24x128xf32>
    %cst_77 = arith.constant dense<0xFF800000> : vector<1x128xf32>
    %82 = vector.multi_reduction <maximumf>, %81, %cst_77 [1] : vector<1x24x128xf32> to vector<1x128xf32>
    %c0_78 = arith.constant 0 : index
    %c0_79 = arith.constant 0 : index
    %c0_80 = arith.constant 0 : index
    %83 = vector.load %arg12[%c0_78, %c0_79, %c0_80] : memref<1x1x128xf32, #tpu.memory_space<vmem>>, vector<1x1x128xf32>
    %84 = vector.shape_cast %83 : vector<1x1x128xf32> to vector<1x128xf32>
    %85 = vector.shape_cast %82 : vector<1x128xf32> to vector<1x1x128xf32>
    tpu.vector_store %arg12[%c0_78, %c0_79, %c0_80], %85 {strides = array<i32>} : memref<1x1x128xf32, #tpu.memory_space<vmem>>, vector<1x1x128xf32>,
    return
  }
  func.func @transform_0(%arg0: i32) -> (i32, i32, i32) {
    %c0_i32 = arith.constant 0 : i32
    %c0_i32_0 = arith.constant 0 : i32
    %c0_i32_1 = arith.constant 0 : i32
    return %arg0, %c0_i32, %c0_i32_0 : i32, i32, i32
  }
  func.func @transform_1(%arg0: i32) -> (i32, i32) {
    %c0_i32 = arith.constant 0 : i32
    %c0_i32_0 = arith.constant 0 : i32
    %c0_i32_1 = arith.constant 0 : i32
    return %c0_i32, %c0_i32_0 : i32, i32
  }
  func.func @transform_2(%arg0: i32) -> (i32, i32, i32) {
    %c0_i32 = arith.constant 0 : i32
    %c0_i32_0 = arith.constant 0 : i32
    %c0_i32_1 = arith.constant 0 : i32
    %c0_i32_2 = arith.constant 0 : i32
    return %c0_i32, %c0_i32_0, %c0_i32_1 : i32, i32, i32
  }
  func.func @transform_3(%arg0: i32) -> (i32, i32) {
    %c0_i32 = arith.constant 0 : i32
    %c0_i32_0 = arith.constant 0 : i32
    %c0_i32_1 = arith.constant 0 : i32
    return %c0_i32, %c0_i32_0 : i32, i32
  }
  func.func @transform_4(%arg0: i32) -> (i32, i32) {
    %c0_i32 = arith.constant 0 : i32
    %c0_i32_0 = arith.constant 0 : i32
    %c0_i32_1 = arith.constant 0 : i32
    return %c0_i32, %c0_i32_0 : i32, i32
  }
  func.func @transform_5(%arg0: i32) -> (i32, i32, i32) {
    %c0_i32 = arith.constant 0 : i32
    %c0_i32_0 = arith.constant 0 : i32
    %c0_i32_1 = arith.constant 0 : i32
    %c0_i32_2 = arith.constant 0 : i32
    return %c0_i32, %c0_i32_0, %c0_i32_1 : i32, i32, i32
  }
  func.func @transform_6(%arg0: i32) -> (i32, i32) {
    %c0_i32 = arith.constant 0 : i32
    %c0_i32_0 = arith.constant 0 : i32
    %c0_i32_1 = arith.constant 0 : i32
    return %c0_i32, %c0_i32_0 : i32, i32
  }
  func.func @transform_7(%arg0: i32) -> (i32, i32) {
    %c0_i32 = arith.constant 0 : i32
    %c0_i32_0 = arith.constant 0 : i32
    %c0_i32_1 = arith.constant 0 : i32
    return %c0_i32, %c0_i32_0 : i32, i32
  }
  func.func @transform_8(%arg0: i32) -> (i32, i32, i32) {
    %c0_i32 = arith.constant 0 : i32
    %c0_i32_0 = arith.constant 0 : i32
    %c0_i32_1 = arith.constant 0 : i32
    %c0_i32_2 = arith.constant 0 : i32
    return %c0_i32, %c0_i32_0, %c0_i32_1 : i32, i32, i32
  }
  func.func @transform_9(%arg0: i32) -> (i32, i32) {
    %c0_i32 = arith.constant 0 : i32
    %c0_i32_0 = arith.constant 0 : i32
    %c0_i32_1 = arith.constant 0 : i32
    return %c0_i32, %c0_i32_0 : i32, i32
  }
  func.func @transform_10(%arg0: i32) -> (i32, i32) {
    %c0_i32 = arith.constant 0 : i32
    %c0_i32_0 = arith.constant 0 : i32
    %c0_i32_1 = arith.constant 0 : i32
    return %c0_i32, %c0_i32_0 : i32, i32
  }
  func.func @transform_11(%arg0: i32) -> (i32, i32, i32) {
    %c0_i32 = arith.constant 0 : i32
    %c0_i32_0 = arith.constant 0 : i32
    %c0_i32_1 = arith.constant 0 : i32
    return %arg0, %c0_i32, %c0_i32_0 : i32, i32, i32
  }
}

</mosaic_0001>

<llo_original>
// kernel: stack_cnn_forward.1
$region0: #{stack_cnn_forward.1}
  #allocation0 [shape = 'u32[]', space=smem, size = 0x4, offset = 0x4, fixed_abs, tag = 'smem constant byte address 0x4 - core index']
  #allocation1 [shape = 'u32[144,128]{1,0:T(1,128)}', space=vmem, size = 0x12000, scoped, tag = 'internal scratch']
  #allocation2 [shape = 'f32[40,128]{1,0:T(8,128)}', space=vmem, size = 0x5000, scoped, tag = 'scratch operand']
  %s0 = inlined_call_operand.vmem [shape: f32[2,24,4], index: 0, kind: input, shape index: {}]
  %s1 = inlined_call_operand.vmem [shape: f32[24,1], index: 1, kind: input, shape index: {}]
  %s2 = inlined_call_operand.vmem [shape: f32[3,4,128], index: 2, kind: input, shape index: {}]
  %s3 = inlined_call_operand.vmem [shape: f32[1,128], index: 3, kind: input, shape index: {}]
  %s4 = inlined_call_operand.vmem [shape: f32[1,128], index: 4, kind: input, shape index: {}]
  %s5 = inlined_call_operand.vmem [shape: f32[3,128,128], index: 5, kind: input, shape index: {}]
  %s6 = inlined_call_operand.vmem [shape: f32[1,128], index: 6, kind: input, shape index: {}]
  %s7 = inlined_call_operand.vmem [shape: f32[1,128], index: 7, kind: input, shape index: {}]
  %s8 = inlined_call_operand.vmem [shape: f32[3,128,128], index: 8, kind: input, shape index: {}]
  %s9 = inlined_call_operand.vmem [shape: f32[1,128], index: 9, kind: input, shape index: {}]
  %s10 = inlined_call_operand.vmem [shape: f32[1,128], index: 10, kind: input, shape index: {}]
  %s11 = inlined_call_operand.hbm [shape: f32[2,1,128], index: 11, kind: output, shape index: {}]
  %s12 = sld [smem:[#allocation0]]
  $region77: #{stack_cnn_forward.1} parent=0
    _
  %s14 = ssub.s32 1, %s12
  %s15 = scalar_select 0, %s14, %s12
  $region1: #{stack_cnn_forward.1} parent=0
    #allocation3 [shape = 'u8[1024]{0}', space=vmem, size = 0x400, scoped, tag = 'output window, operand 0']
    #allocation4 [shape = 's32[2]{0}', space=sflag, size = 0x8, scoped, tag = 'scoped memory for stack_cnn_forward.1']
    %16 = vsyncpa [#allocation4], 0
    %s17 = scalar_lea.sflag [#allocation4], 1
    %18 = vsyncpa %s17, 0
    loop: start=0, step=1, limit=4
    $region2: #{stack_cnn_forward.1} parent=1 // loop_pre_header
      _
    $region3: #{stack_cnn_forward.1} parent=1 // loop_header
      %s20 = sphi 0, %s24
      %p21 = scmp.ge.s32.totalorder %s20, 4
      %s30 = sphi 0, %s32
      %s33 = sphi 0, %s30
      %s34 = sphi 0, %s33
      %s50 = sphi 0, %s34
      %s54 = sphi 0, %s54
      %s56 = sphi 0, %s54
      %s57 = sphi 0, %s56
      %s71 = sphi 0, %s57
      %s75 = sphi 0, %s75
      %s77 = sphi 0, %s75
      %s78 = sphi 0, %s77
      %s92 = sphi 0, %s78
      %s96 = sphi 0, %s96
      %s98 = sphi 0, %s96
      %s99 = sphi 0, %s98
      %s113 = sphi 0, %s99
      %s117 = sphi 0, %s117
      %s119 = sphi 0, %s117
      %s120 = sphi 0, %s119
      %s134 = sphi 0, %s120
      %s138 = sphi 0, %s138
      %s140 = sphi 0, %s138
      %s141 = sphi 0, %s140
      %s155 = sphi 0, %s141
      %s159 = sphi 0, %s159
      %s161 = sphi 0, %s159
      %s162 = sphi 0, %s161
      %s176 = sphi 0, %s162
      %s180 = sphi 0, %s180
      %s182 = sphi 0, %s180
      %s183 = sphi 0, %s182
      %s197 = sphi 0, %s183
      %s201 = sphi 0, %s201
      %s203 = sphi 0, %s201
      %s204 = sphi 0, %s203
      %s218 = sphi 0, %s204
      %s222 = sphi 0, %s222
      %s224 = sphi 0, %s222
      %s225 = sphi 0, %s224
      %s239 = sphi 0, %s225
      %s243 = sphi 0, %s243
      %s245 = sphi 0, %s243
      %s246 = sphi 0, %s245
      %s260 = sphi 0, %s246
      %s266 = sphi 0, %s268
      %s269 = sphi 0, %s266
      %s270 = sphi 0, %s269
      %s286 = sphi 0, %s270
    $region4: #{stack_cnn_forward.1} parent=1 // loop_header_branch
      %23 = sbr.rel (%p21) target = $region8
    $region5: #{stack_cnn_forward.1} parent=1 // loop_body
      %s25 = ssub.s32 %s20, 1
      %s26 = ssub.s32 %s20, 2
      %s27 = sadd.s32 %s20, 1
      %s28 = ssub.s32 %s20, %s27
      %p29 = scmp.eq.s32.totalorder %s28, 0
      %s31 = sadd.s32 %s30, 1
      %s32 = scalar_select %p29, %s30, %s31
      %p35 = pneg %p29
      %p36 = scmp.eq.s32.totalorder %s20, 1
      %p37 = por %p35, %p36
      %p38 = scmp.ne.s32.totalorder %s30, %s33
      %p39 = scmp.eq.s32.totalorder %s20, 0
      %p40 = por %p38, %p39
      %p41 = scmp.ne.s32.totalorder %s30, %s33
      %p42 = scmp.eq.s32.totalorder %s25, 1
      %p43 = por %p41, %p42
      %p44 = scmp.ne.s32.totalorder %s33, %s34
      %p45 = scmp.eq.s32.totalorder %s25, 0
      %p46 = por %p44, %p45
      %p47 = scmp.ne.s32.totalorder %s33, %s34
      %p48 = scmp.eq.s32.totalorder %s26, 1
      %p49 = por %p47, %p48
      %p51 = scmp.ne.s32.totalorder %s34, %s50
      %p52 = scmp.eq.s32.totalorder %s26, 0
      %p53 = por %p51, %p52
      %s55 = sadd.s32 %s54, 1
      %p58 = scmp.eq.s32.totalorder %s20, 1
      %p59 = scmp.ne.s32.totalorder %s54, %s56
      %p60 = scmp.eq.s32.totalorder %s20, 0
      %p61 = por %p59, %p60
      %p62 = scmp.ne.s32.totalorder %s54, %s56
      %p63 = scmp.eq.s32.totalorder %s25, 1
      %p64 = por %p62, %p63
      %p65 = scmp.ne.s32.totalorder %s56, %s57
      %p66 = scmp.eq.s32.totalorder %s25, 0
      %p67 = por %p65, %p66
      %p68 = scmp.ne.s32.totalorder %s56, %s57
      %p69 = scmp.eq.s32.totalorder %s26, 1
      %p70 = por %p68, %p69
      %p72 = scmp.ne.s32.totalorder %s57, %s71
      %p73 = scmp.eq.s32.totalorder %s26, 0
      %p74 = por %p72, %p73
      %s76 = sadd.s32 %s75, 1
      %p79 = scmp.eq.s32.totalorder %s20, 1
      %p80 = scmp.ne.s32.totalorder %s75, %s77
      %p81 = scmp.eq.s32.totalorder %s20, 0
      %p82 = por %p80, %p81
      %p83 = scmp.ne.s32.totalorder %s75, %s77
      %p84 = scmp.eq.s32.totalorder %s25, 1
      %p85 = por %p83, %p84
      %p86 = scmp.ne.s32.totalorder %s77, %s78
      %p87 = scmp.eq.s32.totalorder %s25, 0
      %p88 = por %p86, %p87
      %p89 = scmp.ne.s32.totalorder %s77, %s78
      %p90 = scmp.eq.s32.totalorder %s26, 1
      %p91 = por %p89, %p90
      %p93 = scmp.ne.s32.totalorder %s78, %s92
      %p94 = scmp.eq.s32.totalorder %s26, 0
      %p95 = por %p93, %p94
      %s97 = sadd.s32 %s96, 1
      %p100 = scmp.eq.s32.totalorder %s20, 1
      %p101 = scmp.ne.s32.totalorder %s96, %s98
      %p102 = scmp.eq.s32.totalorder %s20, 0
      %p103 = por %p101, %p102
      %p104 = scmp.ne.s32.totalorder %s96, %s98
      %p105 = scmp.eq.s32.totalorder %s25, 1
      %p106 = por %p104, %p105
      %p107 = scmp.ne.s32.totalorder %s98, %s99
      %p108 = scmp.eq.s32.totalorder %s25, 0
      %p109 = por %p107, %p108
      %p110 = scmp.ne.s32.totalorder %s98, %s99
      %p111 = scmp.eq.s32.totalorder %s26, 1
      %p112 = por %p110, %p111
      %p114 = scmp.ne.s32.totalorder %s99, %s113
      %p115 = scmp.eq.s32.totalorder %s26, 0
      %p116 = por %p114, %p115
      %s118 = sadd.s32 %s117, 1
      %p121 = scmp.eq.s32.totalorder %s20, 1
      %p122 = scmp.ne.s32.totalorder %s117, %s119
      %p123 = scmp.eq.s32.totalorder %s20, 0
      %p124 = por %p122, %p123
      %p125 = scmp.ne.s32.totalorder %s117, %s119
      %p126 = scmp.eq.s32.totalorder %s25, 1
      %p127 = por %p125, %p126
      %p128 = scmp.ne.s32.totalorder %s119, %s120
      %p129 = scmp.eq.s32.totalorder %s25, 0
      %p130 = por %p128, %p129
      %p131 = scmp.ne.s32.totalorder %s119, %s120
      %p132 = scmp.eq.s32.totalorder %s26, 1
      %p133 = por %p131, %p132
      %p135 = scmp.ne.s32.totalorder %s120, %s134
      %p136 = scmp.eq.s32.totalorder %s26, 0
      %p137 = por %p135, %p136
      %s139 = sadd.s32 %s138, 1
      %p142 = scmp.eq.s32.totalorder %s20, 1
      %p143 = scmp.ne.s32.totalorder %s138, %s140
      %p144 = scmp.eq.s32.totalorder %s20, 0
      %p145 = por %p143, %p144
      %p146 = scmp.ne.s32.totalorder %s138, %s140
      %p147 = scmp.eq.s32.totalorder %s25, 1
      %p148 = por %p146, %p147
      %p149 = scmp.ne.s32.totalorder %s140, %s141
      %p150 = scmp.eq.s32.totalorder %s25, 0
      %p151 = por %p149, %p150
      %p152 = scmp.ne.s32.totalorder %s140, %s141
      %p153 = scmp.eq.s32.totalorder %s26, 1
      %p154 = por %p152, %p153
      %p156 = scmp.ne.s32.totalorder %s141, %s155
      %p157 = scmp.eq.s32.totalorder %s26, 0
      %p158 = por %p156, %p157
      %s160 = sadd.s32 %s159, 1
      %p163 = scmp.eq.s32.totalorder %s20, 1
      %p164 = scmp.ne.s32.totalorder %s159, %s161
      %p165 = scmp.eq.s32.totalorder %s20, 0
      %p166 = por %p164, %p165
      %p167 = scmp.ne.s32.totalorder %s159, %s161
      %p168 = scmp.eq.s32.totalorder %s25, 1
      %p169 = por %p167, %p168
      %p170 = scmp.ne.s32.totalorder %s161, %s162
      %p171 = scmp.eq.s32.totalorder %s25, 0
      %p172 = por %p170, %p171
      %p173 = scmp.ne.s32.totalorder %s161, %s162
      %p174 = scmp.eq.s32.totalorder %s26, 1
      %p175 = por %p173, %p174
      %p177 = scmp.ne.s32.totalorder %s162, %s176
      %p178 = scmp.eq.s32.totalorder %s26, 0
      %p179 = por %p177, %p178
      %s181 = sadd.s32 %s180, 1
      %p184 = scmp.eq.s32.totalorder %s20, 1
      %p185 = scmp.ne.s32.totalorder %s180, %s182
      %p186 = scmp.eq.s32.totalorder %s20, 0
      %p187 = por %p185, %p186
      %p188 = scmp.ne.s32.totalorder %s180, %s182
      %p189 = scmp.eq.s32.totalorder %s25, 1
      %p190 = por %p188, %p189
      %p191 = scmp.ne.s32.totalorder %s182, %s183
      %p192 = scmp.eq.s32.totalorder %s25, 0
      %p193 = por %p191, %p192
      %p194 = scmp.ne.s32.totalorder %s182, %s183
      %p195 = scmp.eq.s32.totalorder %s26, 1
      %p196 = por %p194, %p195
      %p198 = scmp.ne.s32.totalorder %s183, %s197
      %p199 = scmp.eq.s32.totalorder %s26, 0
      %p200 = por %p198, %p199
      %s202 = sadd.s32 %s201, 1
      %p205 = scmp.eq.s32.totalorder %s20, 1
      %p206 = scmp.ne.s32.totalorder %s201, %s203
      %p207 = scmp.eq.s32.totalorder %s20, 0
      %p208 = por %p206, %p207
      %p209 = scmp.ne.s32.totalorder %s201, %s203
      %p210 = scmp.eq.s32.totalorder %s25, 1
      %p211 = por %p209, %p210
      %p212 = scmp.ne.s32.totalorder %s203, %s204
      %p213 = scmp.eq.s32.totalorder %s25, 0
      %p214 = por %p212, %p213
      %p215 = scmp.ne.s32.totalorder %s203, %s204
      %p216 = scmp.eq.s32.totalorder %s26, 1
      %p217 = por %p215, %p216
      %p219 = scmp.ne.s32.totalorder %s204, %s218
      %p220 = scmp.eq.s32.totalorder %s26, 0
      %p221 = por %p219, %p220
      %s223 = sadd.s32 %s222, 1
      %p226 = scmp.eq.s32.totalorder %s20, 1
      %p227 = scmp.ne.s32.totalorder %s222, %s224
      %p228 = scmp.eq.s32.totalorder %s20, 0
      %p229 = por %p227, %p228
      %p230 = scmp.ne.s32.totalorder %s222, %s224
      %p231 = scmp.eq.s32.totalorder %s25, 1
      %p232 = por %p230, %p231
      %p233 = scmp.ne.s32.totalorder %s224, %s225
      %p234 = scmp.eq.s32.totalorder %s25, 0
      %p235 = por %p233, %p234
      %p236 = scmp.ne.s32.totalorder %s224, %s225
      %p237 = scmp.eq.s32.totalorder %s26, 1
      %p238 = por %p236, %p237
      %p240 = scmp.ne.s32.totalorder %s225, %s239
      %p241 = scmp.eq.s32.totalorder %s26, 0
      %p242 = por %p240, %p241
      %s244 = sadd.s32 %s243, 1
      %p247 = scmp.eq.s32.totalorder %s20, 1
      %p248 = scmp.ne.s32.totalorder %s243, %s245
      %p249 = scmp.eq.s32.totalorder %s20, 0
      %p250 = por %p248, %p249
      %p251 = scmp.ne.s32.totalorder %s243, %s245
      %p252 = scmp.eq.s32.totalorder %s25, 1
      %p253 = por %p251, %p252
      %p254 = scmp.ne.s32.totalorder %s245, %s246
      %p255 = scmp.eq.s32.totalorder %s25, 0
      %p256 = por %p254, %p255
      %p257 = scmp.ne.s32.totalorder %s245, %s246
      %p258 = scmp.eq.s32.totalorder %s26, 1
      %p259 = por %p257, %p258
      %p261 = scmp.ne.s32.totalorder %s246, %s260
      %p262 = scmp.eq.s32.totalorder %s26, 0
      %p263 = por %p261, %p262
      %s264 = ssub.s32 %s20, %s27
      %p265 = scmp.eq.s32.totalorder %s264, 0
      %s267 = sadd.s32 %s266, 1
      %s268 = scalar_select %p265, %s266, %s267
      %p271 = pneg %p265
      %p272 = scmp.eq.s32.totalorder %s20, 1
      %p273 = por %p271, %p272
      %p274 = scmp.ne.s32.totalorder %s266, %s269
      %p275 = scmp.eq.s32.totalorder %s20, 0
      %p276 = por %p274, %p275
      %p277 = scmp.ne.s32.totalorder %s266, %s269
      %p278 = scmp.eq.s32.totalorder %s25, 1
      %p279 = por %p277, %p278
      %p280 = scmp.ne.s32.totalorder %s269, %s270
      %p281 = scmp.eq.s32.totalorder %s25, 0
      %p282 = por %p280, %p281
      %p283 = scmp.ne.s32.totalorder %s269, %s270
      %p284 = scmp.eq.s32.totalorder %s26, 1
      %p285 = por %p283, %p284
      %p287 = scmp.ne.s32.totalorder %s270, %s286
      %p288 = scmp.eq.s32.totalorder %s26, 0
      %p289 = por %p287, %p288
      %p290 = scmp.le.s32.totalorder 1, %s20
      %p291 = scmp.lt.s32.totalorder %s20, 3
      %p292 = pnand %p290, %p291
      %p293 = pneg %p292
      // Predicated region
      $region9: #{stack_cnn_forward.1} parent=5 // pred_check
        _
      $region10: #{stack_cnn_forward.1} parent=5 // pred_check_branch
        %295 = sbr.rel (%p292) target = $region12
      $region11: #{stack_cnn_forward.1} parent=5 // pred_region
        %s296 = ssub.s32 %s20, 1
        // Predicated region
        $region13: #{stack_cnn_forward.1} parent=11 // pred_check
          %p297 = pneg %p67
        $region14: #{stack_cnn_forward.1} parent=11 // pred_check_branch
          %299 = sbr.rel (%p297) target = $region16
        $region15: #{stack_cnn_forward.1} parent=11 // pred_region
          _
        $region16: #{stack_cnn_forward.1} parent=11 // pred_fallthru
          _
        // Predicated region
        $region17: #{stack_cnn_forward.1} parent=11 // pred_check
          %p300 = pneg %p88
        $region18: #{stack_cnn_forward.1} parent=11 // pred_check_branch
          %302 = sbr.rel (%p300) target = $region20
        $region19: #{stack_cnn_forward.1} parent=11 // pred_region
          _
        $region20: #{stack_cnn_forward.1} parent=11 // pred_fallthru
          _
        // Predicated region
        $region21: #{stack_cnn_forward.1} parent=11 // pred_check
          %p303 = pneg %p109
        $region22: #{stack_cnn_forward.1} parent=11 // pred_check_branch
          %305 = sbr.rel (%p303) target = $region24
        $region23: #{stack_cnn_forward.1} parent=11 // pred_region
          _
        $region24: #{stack_cnn_forward.1} parent=11 // pred_fallthru
          _
        // Predicated region
        $region25: #{stack_cnn_forward.1} parent=11 // pred_check
          %p306 = pneg %p130
        $region26: #{stack_cnn_forward.1} parent=11 // pred_check_branch
          %308 = sbr.rel (%p306) target = $region28
        $region27: #{stack_cnn_forward.1} parent=11 // pred_region
          _
        $region28: #{stack_cnn_forward.1} parent=11 // pred_fallthru
          _
        // Predicated region
        $region29: #{stack_cnn_forward.1} parent=11 // pred_check
          %p309 = pneg %p151
        $region30: #{stack_cnn_forward.1} parent=11 // pred_check_branch
          %311 = sbr.rel (%p309) target = $region32
        $region31: #{stack_cnn_forward.1} parent=11 // pred_region
          _
        $region32: #{stack_cnn_forward.1} parent=11 // pred_fallthru
          _
        // Predicated region
        $region33: #{stack_cnn_forward.1} parent=11 // pred_check
          %p312 = pneg %p172
        $region34: #{stack_cnn_forward.1} parent=11 // pred_check_branch
          %314 = sbr.rel (%p312) target = $region36
        $region35: #{stack_cnn_forward.1} parent=11 // pred_region
          _
        $region36: #{stack_cnn_forward.1} parent=11 // pred_fallthru
          _
        // Predicated region
        $region37: #{stack_cnn_forward.1} parent=11 // pred_check
          %p315 = pneg %p193
        $region38: #{stack_cnn_forward.1} parent=11 // pred_check_branch
          %317 = sbr.rel (%p315) target = $region40
        $region39: #{stack_cnn_forward.1} parent=11 // pred_region
          _
        $region40: #{stack_cnn_forward.1} parent=11 // pred_fallthru
          _
        // Predicated region
        $region41: #{stack_cnn_forward.1} parent=11 // pred_check
          %p318 = pneg %p214
        $region42: #{stack_cnn_forward.1} parent=11 // pred_check_branch
          %320 = sbr.rel (%p318) target = $region44
        $region43: #{stack_cnn_forward.1} parent=11 // pred_region
          _
        $region44: #{stack_cnn_forward.1} parent=11 // pred_fallthru
          _
        // Predicated region
        $region45: #{stack_cnn_forward.1} parent=11 // pred_check
          %p321 = pneg %p235
        $region46: #{stack_cnn_forward.1} parent=11 // pred_check_branch
          %323 = sbr.rel (%p321) target = $region48
        $region47: #{stack_cnn_forward.1} parent=11 // pred_region
          _
        $region48: #{stack_cnn_forward.1} parent=11 // pred_fallthru
          _
        // Predicated region
        $region49: #{stack_cnn_forward.1} parent=11 // pred_check
          %p324 = pneg %p256
        $region50: #{stack_cnn_forward.1} parent=11 // pred_check_branch
          %326 = sbr.rel (%p324) target = $region52
        $region51: #{stack_cnn_forward.1} parent=11 // pred_region
          _
        $region52: #{stack_cnn_forward.1} parent=11 // pred_fallthru
          _
      $region12: #{stack_cnn_forward.1} parent=5 // pred_fallthru
        _
      %p327 = scmp.lt.s32.totalorder %s20, 2
      // Predicated region
      $region53: #{stack_cnn_forward.1} parent=5 // pred_check
        %p328 = pneg %p327
      $region54: #{stack_cnn_forward.1} parent=5 // pred_check_branch
        %330 = sbr.rel (%p328) target = $region56
      $region55: #{stack_cnn_forward.1} parent=5 // pred_region
        // Predicated region
        $region57: #{stack_cnn_forward.1} parent=55 // pred_check
          %p331 = pneg %p40
        $region58: #{stack_cnn_forward.1} parent=55 // pred_check_branch
          %333 = sbr.rel (%p331) target = $region60
        $region59: #{stack_cnn_forward.1} parent=55 // pred_region
          %p334 = scmp.lt.s32.totalorder %s20, 1
          %s335 = scalar_select %p334, %s20, 1
          %s336 = smul.addr %s335, 3
          %s337 = smul.addr %s336, 8
          %s338 = scalar_lea.vmem %s0, %s337
        $region60: #{stack_cnn_forward.1} parent=55 // pred_fallthru
          _
      $region56: #{stack_cnn_forward.1} parent=5 // pred_fallthru
        _
      %p339 = scmp.le.s32.totalorder 1, %s20
      %p340 = scmp.lt.s32.totalorder %s20, 3
      %p341 = pnand %p339, %p340
      %p342 = pneg %p341
      // Predicated region
      $region61: #{stack_cnn_forward.1} parent=5 // pred_check
        _
      $region62: #{stack_cnn_forward.1} parent=5 // pred_check_branch
        %344 = sbr.rel (%p341) target = $region64
      $region63: #{stack_cnn_forward.1} parent=5 // pred_region
        %s345 = ssub.s32 %s20, 1
        %p346 = scmp.lt.s32.totalorder %s25, 1
        %s347 = scalar_select %p346, %s25, 1
        %s348 = smul.addr %s347, 3
        %s349 = smul.addr %s348, 8
        %s350 = scalar_lea.vmem %s0, %s349
        %p351 = pneg %p46
        %p352 = pneg %p43
        %p353 = pneg %p67
        %p354 = pneg %p64
        %p355 = pneg %p88
        %p356 = pneg %p85
        %p357 = pneg %p109
        %p358 = pneg %p106
        %p359 = pneg %p130
        %p360 = pneg %p127
        %p361 = pneg %p151
        %p362 = pneg %p148
        %p363 = pneg %p172
        %p364 = pneg %p169
        %p365 = pneg %p193
        %p366 = pneg %p190
        %p367 = pneg %p214
        %p368 = pneg %p211
        %p369 = pneg %p235
        %p370 = pneg %p232
        %p371 = pneg %p256
        %p372 = pneg %p253
        %p373 = pneg %p282
        %p374 = pneg %p279
        %s375 = sand.u32 %s269, 1
        %s376 = scalar_lea.sflag [#allocation4], %s375
        %s377 = sand.u32 %s269, 1
        %s378 = scalar_lea.vmem [#allocation3], %s377
        %p379 = scmp.lt.s32.totalorder %s25, 1
        %s380 = scalar_select %p379, %s25, 1
        %s381 = smul.addr %s380, 3
        %s382 = smul.addr %s381, 8
        %s383 = scalar_lea.vmem %s0, %s382
        %384 = vst [vmem:[#allocation2] sm:$0xff] 0.0
        %385 = vst [vmem:[#allocation2 + $0x20] sm:$0xff] 0.0
        %v386 = vld [vmem:[%s1] sm:$0xff]
        %v387 = vld [vmem:[%s1 + $0x8] sm:$0xff]
        %v388 = vld [vmem:[%s1 + $0x10] sm:$0xff]
        %v389 = vld [vmem:[%s383] sm:$0xff]
        %v390 = vld [vmem:[%s383 + $0x8] sm:$0xff]
        %v391 = vld [vmem:[%s383 + $0x10] sm:$0xff]
        %vm392 = vcmask 31744
        %393 = vst.msk [vmem:[#allocation2 + $0x8] sm:$0xff] %vm392, %v389
        %394 = vst.msk [vmem:[#allocation2 + $0x10] sm:$0xff] %vm392, %v390
        %395 = vst.msk [vmem:[#allocation2 + $0x18] sm:$0xff] %vm392, %v391
        %v396 = vld [vmem:[#allocation2 + $0x7] sm:$0xff]
        %v397 = vld [vmem:[#allocation2 + $0xf] sm:$0xff]
        %v398 = vld [vmem:[#allocation2 + $0x17] sm:$0xff]
        %v399 = vld [vmem:[%s2] sm:$0xf]
        %v400 = vld [vmem:[#allocation2 + $0x8] sm:$0xff]
        %v401 = vld [vmem:[#allocation2 + $0x10] sm:$0xff]
        %v402 = vld [vmem:[#allocation2 + $0x18] sm:$0xff]
        %s403 = scalar_lea.vmem %s2, 4
        %v404 = vld [vmem:[%s403] sm:$0xf]
        %v406 = vsel %vm392, %v400, 0
        %v409 = vsel %vm392, %v401, 0
        %v412 = vsel %vm392, %v402, 0
        %vm414 = vcmask 1043456
        %v416 = vsel %vm414, %v404, 0
        %418 = vmatprep.subr.mxu0 0.0
        %419 = vmatpush1.msra.mxu0 %v416
        %420 = vmatprep.subr.mxu0 0.0
        %421 = vmatpush1.msra.mxu0 0.0
        %422 = vmatprep.subr.mxu0 0.0
        %423 = vmatpush1.msra.mxu0 0.0
        %424 = vmatprep.subr.mxu0 0.0
        %425 = vmatpush1.msra.mxu0 0.0
        %426 = vmatprep.subr.mxu0 0.0
        %427 = vmatpush1.msra.mxu0 0.0
        %428 = vmatprep.subr.mxu0 0.0
        %429 = vmatpush1.msra.mxu0 0.0
        %430 = vmatprep.subr.mxu0 0.0
        %431 = vmatpush1.msra.mxu0 0.0
        %432 = vmatprep.subr.mxu0 0.0
        %433 = vmatpush1.msra.mxu0 0.0
        %434 = vmatprep.subr.mxu0 0.0
        %435 = vmatpush1.msra.mxu0 0.0
        %436 = vmatprep.subr.mxu0 0.0
        %437 = vmatpush1.msra.mxu0 0.0
        %438 = vmatprep.subr.mxu0 0.0
        %439 = vmatpush1.msra.mxu0 0.0
        %440 = vmatprep.subr.mxu0 0.0
        %441 = vmatpush1.msra.mxu0 0.0
        %442 = vmatprep.subr.mxu0 0.0
        %443 = vmatpush1.msra.mxu0 0.0
        %444 = vmatprep.subr.mxu0 0.0
        %445 = vmatpush1.msra.mxu0 0.0
        %446 = vmatprep.subr.mxu0 0.0
        %447 = vmatpush1.msra.mxu0 0.0
        %448 = vmatprep.subr.mxu0 0.0
        %449 = vmatpush1.msra.mxu0 0.0
        %450 = vmatprep.subr.mxu0 0.0
        %451 = vmatpush1.msra.mxu0 0.0
        %452 = vmatprep.subr.mxu0 0.0
        %453 = vmatpush1.msra.mxu0 0.0
        %454 = vmatprep.subr.mxu0 0.0
        %455 = vmatpush1.msra.mxu0 0.0
        %456 = vmatprep.subr.mxu0 0.0
        %457 = vmatpush1.msra.mxu0 0.0
        %458 = vmatprep.subr.mxu0 0.0
        %459 = vmatpush1.msra.mxu0 0.0
        %460 = vmatprep.subr.mxu0 0.0
        %461 = vmatpush1.msra.mxu0 0.0
        %462 = vmatprep.subr.mxu0 0.0
        %463 = vmatpush1.msra.mxu0 0.0
        %464 = vmatprep.subr.mxu0 0.0
        %465 = vmatpush1.msra.mxu0 0.0
        %466 = vmatprep.subr.mxu0 0.0
        %467 = vmatpush1.msra.mxu0 0.0
        %468 = vmatprep.subr.mxu0 0.0
        %469 = vmatpush1.msra.mxu0 0.0
        %470 = vmatprep.subr.mxu0 0.0
        %471 = vmatpush1.msra.mxu0 0.0
        %472 = vmatprep.subr.mxu0 0.0
        %473 = vmatpush1.msra.mxu0 0.0
        %474 = vmatprep.subr.mxu0 0.0
        %475 = vmatpush1.msra.mxu0 0.0
        %476 = vmatprep.subr.mxu0 0.0
        %477 = vmatpush1.msra.mxu0 0.0
        %478 = vmatprep.subr.mxu0 0.0
        %479 = vmatpush1.msra.mxu0 0.0
        %480 = vmatprep.subr.mxu0 0.0
        %481 = vmatpush1.msra.mxu0 0.0
        %482 = vmatprep.mubr.f32.mxu0 0.0
        %483 = vmatmul.mubr.f32.gmra.mrb[0].mxu0 %v406
        %v484 = vpop.f32.mrb[0].mxu0
        %v485 = vadd.f32 0.0, %v484
        %v486 = vpop.f32.mrb[0].mxu0
        %487 = vmatprep.mubr.f32.mxu0 0.0
        %488 = vmatmul.mubr.f32.gmra.mrb[0].mxu0 %v409
        %v489 = vpop.f32.mrb[0].mxu0
        %v490 = vadd.f32 0.0, %v489
        %v491 = vpop.f32.mrb[0].mxu0
        %492 = vmatprep.mubr.f32.mxu0 0.0
        %493 = vmatmul.mubr.f32.gmra.mrb[0].mxu0 %v412
        %v494 = vpop.f32.mrb[0].mxu0
        %v495 = vadd.f32 0.0, %v494
        %v496 = vpop.f32.mrb[0].mxu0
        %497 = vdwg.mxu0
        %v499 = vsel %vm392, %v396, 0
        %v502 = vsel %vm392, %v397, 0
        %v505 = vsel %vm392, %v398, 0
        %v508 = vsel %vm414, %v399, 0
        %510 = vmatprep.subr.mxu0 0.0
        %511 = vmatpush1.msra.mxu0 %v508
        %512 = vmatprep.subr.mxu0 0.0
        %513 = vmatpush1.msra.mxu0 0.0
        %514 = vmatprep.subr.mxu0 0.0
        %515 = vmatpush1.msra.mxu0 0.0
        %516 = vmatprep.subr.mxu0 0.0
        %517 = vmatpush1.msra.mxu0 0.0
        %518 = vmatprep.subr.mxu0 0.0
        %519 = vmatpush1.msra.mxu0 0.0
        %520 = vmatprep.subr.mxu0 0.0
        %521 = vmatpush1.msra.mxu0 0.0
        %522 = vmatprep.subr.mxu0 0.0
        %523 = vmatpush1.msra.mxu0 0.0
        %524 = vmatprep.subr.mxu0 0.0
        %525 = vmatpush1.msra.mxu0 0.0
        %526 = vmatprep.subr.mxu0 0.0
        %527 = vmatpush1.msra.mxu0 0.0
        %528 = vmatprep.subr.mxu0 0.0
        %529 = vmatpush1.msra.mxu0 0.0
        %530 = vmatprep.subr.mxu0 0.0
        %531 = vmatpush1.msra.mxu0 0.0
        %532 = vmatprep.subr.mxu0 0.0
        %533 = vmatpush1.msra.mxu0 0.0
        %534 = vmatprep.subr.mxu0 0.0
        %535 = vmatpush1.msra.mxu0 0.0
        %536 = vmatprep.subr.mxu0 0.0
        %537 = vmatpush1.msra.mxu0 0.0
        %538 = vmatprep.subr.mxu0 0.0
        %539 = vmatpush1.msra.mxu0 0.0
        %540 = vmatprep.subr.mxu0 0.0
        %541 = vmatpush1.msra.mxu0 0.0
        %542 = vmatprep.subr.mxu0 0.0
        %543 = vmatpush1.msra.mxu0 0.0
        %544 = vmatprep.subr.mxu0 0.0
        %545 = vmatpush1.msra.mxu0 0.0
        %546 = vmatprep.subr.mxu0 0.0
        %547 = vmatpush1.msra.mxu0 0.0
        %548 = vmatprep.subr.mxu0 0.0
        %549 = vmatpush1.msra.mxu0 0.0
        %550 = vmatprep.subr.mxu0 0.0
        %551 = vmatpush1.msra.mxu0 0.0
        %552 = vmatprep.subr.mxu0 0.0
        %553 = vmatpush1.msra.mxu0 0.0
        %554 = vmatprep.subr.mxu0 0.0
        %555 = vmatpush1.msra.mxu0 0.0
        %556 = vmatprep.subr.mxu0 0.0
        %557 = vmatpush1.msra.mxu0 0.0
        %558 = vmatprep.subr.mxu0 0.0
        %559 = vmatpush1.msra.mxu0 0.0
        %560 = vmatprep.subr.mxu0 0.0
        %561 = vmatpush1.msra.mxu0 0.0
        %562 = vmatprep.subr.mxu0 0.0
        %563 = vmatpush1.msra.mxu0 0.0
        %564 = vmatprep.subr.mxu0 0.0
        %565 = vmatpush1.msra.mxu0 0.0
        %566 = vmatprep.subr.mxu0 0.0
        %567 = vmatpush1.msra.mxu0 0.0
        %568 = vmatprep.subr.mxu0 0.0
        %569 = vmatpush1.msra.mxu0 0.0
        %570 = vmatprep.subr.mxu0 0.0
        %571 = vmatpush1.msra.mxu0 0.0
        %572 = vmatprep.subr.mxu0 0.0
        %573 = vmatpush1.msra.mxu0 0.0
        %574 = vmatprep.mubr.f32.mxu0 0.0
        %575 = vmatmul.mubr.f32.gmra.mrb[0].mxu0 %v499
        %v576 = vpop.f32.mrb[0].mxu0
        %v577 = vadd.f32 %v485, %v576
        %v578 = vpop.f32.mrb[0].mxu0
        %579 = vmatprep.mubr.f32.mxu0 0.0
        %580 = vmatmul.mubr.f32.gmra.mrb[0].mxu0 %v502
        %v581 = vpop.f32.mrb[0].mxu0
        %v582 = vadd.f32 %v490, %v581
        %v583 = vpop.f32.mrb[0].mxu0
        %584 = vmatprep.mubr.f32.mxu0 0.0
        %585 = vmatmul.mubr.f32.gmra.mrb[0].mxu0 %v505
        %v586 = vpop.f32.mrb[0].mxu0
        %v587 = vadd.f32 %v495, %v586
        %v588 = vpop.f32.mrb[0].mxu0
        %589 = vdwg.mxu0
        %v590 = vld [vmem:[#allocation2 + $0x9] sm:$0xff]
        %v591 = vld [vmem:[#allocation2 + $0x11] sm:$0xff]
        %v592 = vld [vmem:[#allocation2 + $0x19] sm:$0xff]
        %s593 = scalar_lea.vmem %s2, 8
        %v594 = vld [vmem:[%s593] sm:$0xf]
        %v596 = vsel %vm392, %v590, 0
        %v599 = vsel %vm392, %v591, 0
        %v602 = vsel %vm392, %v592, 0
        %v605 = vsel %vm414, %v594, 0
        %607 = vmatprep.subr.mxu0 0.0
        %608 = vmatpush1.msra.mxu0 %v605
        %609 = vmatprep.subr.mxu0 0.0
        %610 = vmatpush1.msra.mxu0 0.0
        %611 = vmatprep.subr.mxu0 0.0
        %612 = vmatpush1.msra.mxu0 0.0
        %613 = vmatprep.subr.mxu0 0.0
        %614 = vmatpush1.msra.mxu0 0.0
        %615 = vmatprep.subr.mxu0 0.0
        %616 = vmatpush1.msra.mxu0 0.0
        %617 = vmatprep.subr.mxu0 0.0
        %618 = vmatpush1.msra.mxu0 0.0
        %619 = vmatprep.subr.mxu0 0.0
        %620 = vmatpush1.msra.mxu0 0.0
        %621 = vmatprep.subr.mxu0 0.0
        %622 = vmatpush1.msra.mxu0 0.0
        %623 = vmatprep.subr.mxu0 0.0
        %624 = vmatpush1.msra.mxu0 0.0
        %625 = vmatprep.subr.mxu0 0.0
        %626 = vmatpush1.msra.mxu0 0.0
        %627 = vmatprep.subr.mxu0 0.0
        %628 = vmatpush1.msra.mxu0 0.0
        %629 = vmatprep.subr.mxu0 0.0
        %630 = vmatpush1.msra.mxu0 0.0
        %631 = vmatprep.subr.mxu0 0.0
        %632 = vmatpush1.msra.mxu0 0.0
        %633 = vmatprep.subr.mxu0 0.0
        %634 = vmatpush1.msra.mxu0 0.0
        %635 = vmatprep.subr.mxu0 0.0
        %636 = vmatpush1.msra.mxu0 0.0
        %637 = vmatprep.subr.mxu0 0.0
        %638 = vmatpush1.msra.mxu0 0.0
        %639 = vmatprep.subr.mxu0 0.0
        %640 = vmatpush1.msra.mxu0 0.0
        %641 = vmatprep.subr.mxu0 0.0
        %642 = vmatpush1.msra.mxu0 0.0
        %643 = vmatprep.subr.mxu0 0.0
        %644 = vmatpush1.msra.mxu0 0.0
        %645 = vmatprep.subr.mxu0 0.0
        %646 = vmatpush1.msra.mxu0 0.0
        %647 = vmatprep.subr.mxu0 0.0
        %648 = vmatpush1.msra.mxu0 0.0
        %649 = vmatprep.subr.mxu0 0.0
        %650 = vmatpush1.msra.mxu0 0.0
        %651 = vmatprep.subr.mxu0 0.0
        %652 = vmatpush1.msra.mxu0 0.0
        %653 = vmatprep.subr.mxu0 0.0
        %654 = vmatpush1.msra.mxu0 0.0
        %655 = vmatprep.subr.mxu0 0.0
        %656 = vmatpush1.msra.mxu0 0.0
        %657 = vmatprep.subr.mxu0 0.0
        %658 = vmatpush1.msra.mxu0 0.0
        %659 = vmatprep.subr.mxu0 0.0
        %660 = vmatpush1.msra.mxu0 0.0
        %661 = vmatprep.subr.mxu0 0.0
        %662 = vmatpush1.msra.mxu0 0.0
        %663 = vmatprep.subr.mxu0 0.0
        %664 = vmatpush1.msra.mxu0 0.0
        %665 = vmatprep.subr.mxu0 0.0
        %666 = vmatpush1.msra.mxu0 0.0
        %667 = vmatprep.subr.mxu0 0.0
        %668 = vmatpush1.msra.mxu0 0.0
        %669 = vmatprep.subr.mxu0 0.0
        %670 = vmatpush1.msra.mxu0 0.0
        %671 = vmatprep.mubr.f32.mxu0 0.0
        %672 = vmatmul.mubr.f32.gmra.mrb[0].mxu0 %v596
        %v673 = vpop.f32.mrb[0].mxu0
        %v674 = vadd.f32 0.0, %v673
        %v675 = vpop.f32.mrb[0].mxu0
        %676 = vmatprep.mubr.f32.mxu0 0.0
        %677 = vmatmul.mubr.f32.gmra.mrb[0].mxu0 %v599
        %v678 = vpop.f32.mrb[0].mxu0
        %v679 = vadd.f32 0.0, %v678
        %v680 = vpop.f32.mrb[0].mxu0
        %681 = vmatprep.mubr.f32.mxu0 0.0
        %682 = vmatmul.mubr.f32.gmra.mrb[0].mxu0 %v602
        %v683 = vpop.f32.mrb[0].mxu0
        %v684 = vadd.f32 0.0, %v683
        %v685 = vpop.f32.mrb[0].mxu0
        %686 = vdwg.mxu0
        %v687 = vadd.f32 %v577, %v674
        %v688 = vadd.f32 %v582, %v679
        %v689 = vadd.f32 %v587, %v684
        %v690 = vld [vmem:[%s3] sm:$0x1]
        %v692 = vlaneseq
        %v693 = vshrl.u32 %v692, 7
        %v694 = vsub.s32 0, %v693
        %v695 = vrot.slane %v690, %v694
        %v697 = vmul.f32 %v687, %v695
        %v698 = vmul.f32 %v688, %v695
        %v699 = vmul.f32 %v689, %v695
        %v700 = vld [vmem:[%s4] sm:$0x1]
        %v702 = vlaneseq
        %v703 = vshrl.u32 %v702, 7
        %v704 = vsub.s32 0, %v703
        %v705 = vrot.slane %v700, %v704
        %v707 = vadd.f32 %v697, %v705
        %v708 = vadd.f32 %v698, %v705
        %v709 = vadd.f32 %v699, %v705
        %v710 = vmax.f32 %v707, 0.0
        %v711 = vmax.f32 %v708, 0.0
        %v712 = vmax.f32 %v709, 0.0
        %714 = vset.pattern.permute.xlu0 0
        %715 = vperm.xlu0 %714, %v386
        %v716 = vpop.permute.xlu0 %715
        %719 = vset.pattern.permute.xlu0 0
        %720 = vperm.xlu0 %719, %v387
        %v721 = vpop.permute.xlu0 %720
        %724 = vset.pattern.permute.xlu0 0
        %725 = vperm.xlu0 %724, %v388
        %v726 = vpop.permute.xlu0 %725
        %v728 = vmul.f32 %v710, %v716
        %v729 = vmul.f32 %v711, %v721
        %v730 = vmul.f32 %v712, %v726
        %731 = vst [vmem:[#allocation2 + $0x8] sm:$0xff] %v728
        %732 = vst [vmem:[#allocation2 + $0x10] sm:$0xff] %v729
        %733 = vst [vmem:[#allocation2 + $0x18] sm:$0xff] %v730
        %v734 = vld [vmem:[#allocation2 + $0x7] sm:$0xff]
        %v735 = vld [vmem:[#allocation2 + $0xf] sm:$0xff]
        %v736 = vld [vmem:[#allocation2 + $0x17] sm:$0xff]
        %v737 = vld [vmem:[%s5] sm:$0xff]
        %v738 = vld [vmem:[%s5 + $0x8] sm:$0xff]
        %v739 = vld [vmem:[%s5 + $0x10] sm:$0xff]
        %v740 = vld [vmem:[%s5 + $0x18] sm:$0xff]
        %v741 = vld [vmem:[%s5 + $0x20] sm:$0xff]
        %v742 = vld [vmem:[%s5 + $0x28] sm:$0xff]
        %v743 = vld [vmem:[%s5 + $0x30] sm:$0xff]
        %v744 = vld [vmem:[%s5 + $0x38] sm:$0xff]
        %v745 = vld [vmem:[%s5 + $0x40] sm:$0xff]
        %v746 = vld [vmem:[%s5 + $0x48] sm:$0xff]
        %v747 = vld [vmem:[%s5 + $0x50] sm:$0xff]
        %v748 = vld [vmem:[%s5 + $0x58] sm:$0xff]
        %v749 = vld [vmem:[%s5 + $0x60] sm:$0xff]
        %v750 = vld [vmem:[%s5 + $0x68] sm:$0xff]
        %v751 = vld [vmem:[%s5 + $0x70] sm:$0xff]
        %v752 = vld [vmem:[%s5 + $0x78] sm:$0xff]
        %v753 = vld [vmem:[#allocation2 + $0x8] sm:$0xff]
        %v754 = vld [vmem:[#allocation2 + $0x10] sm:$0xff]
        %v755 = vld [vmem:[#allocation2 + $0x18] sm:$0xff]
        %s756 = scalar_lea.vmem %s5, 128
        %v757 = vld [vmem:[%s756] sm:$0xff]
        %v758 = vld [vmem:[%s756 + $0x8] sm:$0xff]
        %v759 = vld [vmem:[%s756 + $0x10] sm:$0xff]
        %v760 = vld [vmem:[%s756 + $0x18] sm:$0xff]
        %v761 = vld [vmem:[%s756 + $0x20] sm:$0xff]
        %v762 = vld [vmem:[%s756 + $0x28] sm:$0xff]
        %v763 = vld [vmem:[%s756 + $0x30] sm:$0xff]
        %v764 = vld [vmem:[%s756 + $0x38] sm:$0xff]
        %v765 = vld [vmem:[%s756 + $0x40] sm:$0xff]
        %v766 = vld [vmem:[%s756 + $0x48] sm:$0xff]
        %v767 = vld [vmem:[%s756 + $0x50] sm:$0xff]
        %v768 = vld [vmem:[%s756 + $0x58] sm:$0xff]
        %v769 = vld [vmem:[%s756 + $0x60] sm:$0xff]
        %v770 = vld [vmem:[%s756 + $0x68] sm:$0xff]
        %v771 = vld [vmem:[%s756 + $0x70] sm:$0xff]
        %v772 = vld [vmem:[%s756 + $0x78] sm:$0xff]
        %773 = vmatprep.subr.mxu0 0.0
        %774 = vmatpush1.msra.mxu0 %v757
        %775 = vmatprep.subr.mxu0 0.0
        %776 = vmatpush1.msra.mxu0 %v758
        %777 = vmatprep.subr.mxu0 0.0
        %778 = vmatpush1.msra.mxu0 %v759
        %779 = vmatprep.subr.mxu0 0.0
        %780 = vmatpush1.msra.mxu0 %v760
        %781 = vmatprep.subr.mxu0 0.0
        %782 = vmatpush1.msra.mxu0 %v761
        %783 = vmatprep.subr.mxu0 0.0
        %784 = vmatpush1.msra.mxu0 %v762
        %785 = vmatprep.subr.mxu0 0.0
        %786 = vmatpush1.msra.mxu0 %v763
        %787 = vmatprep.subr.mxu0 0.0
        %788 = vmatpush1.msra.mxu0 %v764
        %789 = vmatprep.subr.mxu0 0.0
        %790 = vmatpush1.msra.mxu0 %v765
        %791 = vmatprep.subr.mxu0 0.0
        %792 = vmatpush1.msra.mxu0 %v766
        %793 = vmatprep.subr.mxu0 0.0
        %794 = vmatpush1.msra.mxu0 %v767
        %795 = vmatprep.subr.mxu0 0.0
        %796 = vmatpush1.msra.mxu0 %v768
        %797 = vmatprep.subr.mxu0 0.0
        %798 = vmatpush1.msra.mxu0 %v769
        %799 = vmatprep.subr.mxu0 0.0
        %800 = vmatpush1.msra.mxu0 %v770
        %801 = vmatprep.subr.mxu0 0.0
        %802 = vmatpush1.msra.mxu0 %v771
        %803 = vmatprep.subr.mxu0 0.0
        %804 = vmatpush1.msra.mxu0 %v772
        %805 = vmatprep.subr.mxu0 0.0
        %806 = vmatpush1.msra.mxu0 0.0
        %807 = vmatprep.subr.mxu0 0.0
        %808 = vmatpush1.msra.mxu0 0.0
        %809 = vmatprep.subr.mxu0 0.0
        %810 = vmatpush1.msra.mxu0 0.0
        %811 = vmatprep.subr.mxu0 0.0
        %812 = vmatpush1.msra.mxu0 0.0
        %813 = vmatprep.subr.mxu0 0.0
        %814 = vmatpush1.msra.mxu0 0.0
        %815 = vmatprep.subr.mxu0 0.0
        %816 = vmatpush1.msra.mxu0 0.0
        %817 = vmatprep.subr.mxu0 0.0
        %818 = vmatpush1.msra.mxu0 0.0
        %819 = vmatprep.subr.mxu0 0.0
        %820 = vmatpush1.msra.mxu0 0.0
        %821 = vmatprep.subr.mxu0 0.0
        %822 = vmatpush1.msra.mxu0 0.0
        %823 = vmatprep.subr.mxu0 0.0
        %824 = vmatpush1.msra.mxu0 0.0
        %825 = vmatprep.subr.mxu0 0.0
        %826 = vmatpush1.msra.mxu0 0.0
        %827 = vmatprep.subr.mxu0 0.0
        %828 = vmatpush1.msra.mxu0 0.0
        %829 = vmatprep.subr.mxu0 0.0
        %830 = vmatpush1.msra.mxu0 0.0
        %831 = vmatprep.subr.mxu0 0.0
        %832 = vmatpush1.msra.mxu0 0.0
        %833 = vmatprep.subr.mxu0 0.0
        %834 = vmatpush1.msra.mxu0 0.0
        %835 = vmatprep.subr.mxu0 0.0
        %836 = vmatpush1.msra.mxu0 0.0
        %837 = vmatprep.mubr.f32.mxu0 0.0
        %838 = vmatmul.mubr.f32.gmra.mrb[0].mxu0 %v753
        %v839 = vpop.f32.mrb[0].mxu0
        %v840 = vadd.f32 0.0, %v839
        %v841 = vpop.f32.mrb[0].mxu0
        %842 = vmatprep.mubr.f32.mxu0 0.0
        %843 = vmatmul.mubr.f32.gmra.mrb[0].mxu0 %v754
        %v844 = vpop.f32.mrb[0].mxu0
        %v845 = vadd.f32 0.0, %v844
        %v846 = vpop.f32.mrb[0].mxu0
        %847 = vmatprep.mubr.f32.mxu0 0.0
        %848 = vmatmul.mubr.f32.gmra.mrb[0].mxu0 %v755
        %v849 = vpop.f32.mrb[0].mxu0
        %v850 = vadd.f32 0.0, %v849
        %v851 = vpop.f32.mrb[0].mxu0
        %852 = vdwg.mxu0
        %853 = vmatprep.subr.mxu0 0.0
        %854 = vmatpush1.msra.mxu0 %v737
        %855 = vmatprep.subr.mxu0 0.0
        %856 = vmatpush1.msra.mxu0 %v738
        %857 = vmatprep.subr.mxu0 0.0
        %858 = vmatpush1.msra.mxu0 %v739
        %859 = vmatprep.subr.mxu0 0.0
        %860 = vmatpush1.msra.mxu0 %v740
        %861 = vmatprep.subr.mxu0 0.0
        %862 = vmatpush1.msra.mxu0 %v741
        %863 = vmatprep.subr.mxu0 0.0
        %864 = vmatpush1.msra.mxu0 %v742
        %865 = vmatprep.subr.mxu0 0.0
        %866 = vmatpush1.msra.mxu0 %v743
        %867 = vmatprep.subr.mxu0 0.0
        %868 = vmatpush1.msra.mxu0 %v744
        %869 = vmatprep.subr.mxu0 0.0
        %870 = vmatpush1.msra.mxu0 %v745
        %871 = vmatprep.subr.mxu0 0.0
        %872 = vmatpush1.msra.mxu0 %v746
        %873 = vmatprep.subr.mxu0 0.0
        %874 = vmatpush1.msra.mxu0 %v747
        %875 = vmatprep.subr.mxu0 0.0
        %876 = vmatpush1.msra.mxu0 %v748
        %877 = vmatprep.subr.mxu0 0.0
        %878 = vmatpush1.msra.mxu0 %v749
        %879 = vmatprep.subr.mxu0 0.0
        %880 = vmatpush1.msra.mxu0 %v750
        %881 = vmatprep.subr.mxu0 0.0
        %882 = vmatpush1.msra.mxu0 %v751
        %883 = vmatprep.subr.mxu0 0.0
        %884 = vmatpush1.msra.mxu0 %v752
        %885 = vmatprep.subr.mxu0 0.0
        %886 = vmatpush1.msra.mxu0 0.0
        %887 = vmatprep.subr.mxu0 0.0
        %888 = vmatpush1.msra.mxu0 0.0
        %889 = vmatprep.subr.mxu0 0.0
        %890 = vmatpush1.msra.mxu0 0.0
        %891 = vmatprep.subr.mxu0 0.0
        %892 = vmatpush1.msra.mxu0 0.0
        %893 = vmatprep.subr.mxu0 0.0
        %894 = vmatpush1.msra.mxu0 0.0
        %895 = vmatprep.subr.mxu0 0.0
        %896 = vmatpush1.msra.mxu0 0.0
        %897 = vmatprep.subr.mxu0 0.0
        %898 = vmatpush1.msra.mxu0 0.0
        %899 = vmatprep.subr.mxu0 0.0
        %900 = vmatpush1.msra.mxu0 0.0
        %901 = vmatprep.subr.mxu0 0.0
        %902 = vmatpush1.msra.mxu0 0.0
        %903 = vmatprep.subr.mxu0 0.0
        %904 = vmatpush1.msra.mxu0 0.0
        %905 = vmatprep.subr.mxu0 0.0
        %906 = vmatpush1.msra.mxu0 0.0
        %907 = vmatprep.subr.mxu0 0.0
        %908 = vmatpush1.msra.mxu0 0.0
        %909 = vmatprep.subr.mxu0 0.0
        %910 = vmatpush1.msra.mxu0 0.0
        %911 = vmatprep.subr.mxu0 0.0
        %912 = vmatpush1.msra.mxu0 0.0
        %913 = vmatprep.subr.mxu0 0.0
        %914 = vmatpush1.msra.mxu0 0.0
        %915 = vmatprep.subr.mxu0 0.0
        %916 = vmatpush1.msra.mxu0 0.0
        %917 = vmatprep.mubr.f32.mxu0 0.0
        %918 = vmatmul.mubr.f32.gmra.mrb[0].mxu0 %v734
        %v919 = vpop.f32.mrb[0].mxu0
        %v920 = vadd.f32 %v840, %v919
        %v921 = vpop.f32.mrb[0].mxu0
        %922 = vmatprep.mubr.f32.mxu0 0.0
        %923 = vmatmul.mubr.f32.gmra.mrb[0].mxu0 %v735
        %v924 = vpop.f32.mrb[0].mxu0
        %v925 = vadd.f32 %v845, %v924
        %v926 = vpop.f32.mrb[0].mxu0
        %927 = vmatprep.mubr.f32.mxu0 0.0
        %928 = vmatmul.mubr.f32.gmra.mrb[0].mxu0 %v736
        %v929 = vpop.f32.mrb[0].mxu0
        %v930 = vadd.f32 %v850, %v929
        %v931 = vpop.f32.mrb[0].mxu0
        %932 = vdwg.mxu0
        %v933 = vld [vmem:[#allocation2 + $0x9] sm:$0xff]
        %v934 = vld [vmem:[#allocation2 + $0x11] sm:$0xff]
        %v935 = vld [vmem:[#allocation2 + $0x19] sm:$0xff]
        %s936 = scalar_lea.vmem %s5, 256
        %v937 = vld [vmem:[%s936] sm:$0xff]
        %v938 = vld [vmem:[%s936 + $0x8] sm:$0xff]
        %v939 = vld [vmem:[%s936 + $0x10] sm:$0xff]
        %v940 = vld [vmem:[%s936 + $0x18] sm:$0xff]
        %v941 = vld [vmem:[%s936 + $0x20] sm:$0xff]
        %v942 = vld [vmem:[%s936 + $0x28] sm:$0xff]
        %v943 = vld [vmem:[%s936 + $0x30] sm:$0xff]
        %v944 = vld [vmem:[%s936 + $0x38] sm:$0xff]
        %v945 = vld [vmem:[%s936 + $0x40] sm:$0xff]
        %v946 = vld [vmem:[%s936 + $0x48] sm:$0xff]
        %v947 = vld [vmem:[%s936 + $0x50] sm:$0xff]
        %v948 = vld [vmem:[%s936 + $0x58] sm:$0xff]
        %v949 = vld [vmem:[%s936 + $0x60] sm:$0xff]
        %v950 = vld [vmem:[%s936 + $0x68] sm:$0xff]
        %v951 = vld [vmem:[%s936 + $0x70] sm:$0xff]
        %v952 = vld [vmem:[%s936 + $0x78] sm:$0xff]
        %953 = vmatprep.subr.mxu0 0.0
        %954 = vmatpush1.msra.mxu0 %v937
        %955 = vmatprep.subr.mxu0 0.0
        %956 = vmatpush1.msra.mxu0 %v938
        %957 = vmatprep.subr.mxu0 0.0
        %958 = vmatpush1.msra.mxu0 %v939
        %959 = vmatprep.subr.mxu0 0.0
        %960 = vmatpush1.msra.mxu0 %v940
        %961 = vmatprep.subr.mxu0 0.0
        %962 = vmatpush1.msra.mxu0 %v941
        %963 = vmatprep.subr.mxu0 0.0
        %964 = vmatpush1.msra.mxu0 %v942
        %965 = vmatprep.subr.mxu0 0.0
        %966 = vmatpush1.msra.mxu0 %v943
        %967 = vmatprep.subr.mxu0 0.0
        %968 = vmatpush1.msra.mxu0 %v944
        %969 = vmatprep.subr.mxu0 0.0
        %970 = vmatpush1.msra.mxu0 %v945
        %971 = vmatprep.subr.mxu0 0.0
        %972 = vmatpush1.msra.mxu0 %v946
        %973 = vmatprep.subr.mxu0 0.0
        %974 = vmatpush1.msra.mxu0 %v947
        %975 = vmatprep.subr.mxu0 0.0
        %976 = vmatpush1.msra.mxu0 %v948
        %977 = vmatprep.subr.mxu0 0.0
        %978 = vmatpush1.msra.mxu0 %v949
        %979 = vmatprep.subr.mxu0 0.0
        %980 = vmatpush1.msra.mxu0 %v950
        %981 = vmatprep.subr.mxu0 0.0
        %982 = vmatpush1.msra.mxu0 %v951
        %983 = vmatprep.subr.mxu0 0.0
        %984 = vmatpush1.msra.mxu0 %v952
        %985 = vmatprep.subr.mxu0 0.0
        %986 = vmatpush1.msra.mxu0 0.0
        %987 = vmatprep.subr.mxu0 0.0
        %988 = vmatpush1.msra.mxu0 0.0
        %989 = vmatprep.subr.mxu0 0.0
        %990 = vmatpush1.msra.mxu0 0.0
        %991 = vmatprep.subr.mxu0 0.0
        %992 = vmatpush1.msra.mxu0 0.0
        %993 = vmatprep.subr.mxu0 0.0
        %994 = vmatpush1.msra.mxu0 0.0
        %995 = vmatprep.subr.mxu0 0.0
        %996 = vmatpush1.msra.mxu0 0.0
        %997 = vmatprep.subr.mxu0 0.0
        %998 = vmatpush1.msra.mxu0 0.0
        %999 = vmatprep.subr.mxu0 0.0
        %1000 = vmatpush1.msra.mxu0 0.0
        %1001 = vmatprep.subr.mxu0 0.0
        %1002 = vmatpush1.msra.mxu0 0.0
        %1003 = vmatprep.subr.mxu0 0.0
        %1004 = vmatpush1.msra.mxu0 0.0
        %1005 = vmatprep.subr.mxu0 0.0
        %1006 = vmatpush1.msra.mxu0 0.0
        %1007 = vmatprep.subr.mxu0 0.0
        %1008 = vmatpush1.msra.mxu0 0.0
        %1009 = vmatprep.subr.mxu0 0.0
        %1010 = vmatpush1.msra.mxu0 0.0
        %1011 = vmatprep.subr.mxu0 0.0
        %1012 = vmatpush1.msra.mxu0 0.0
        %1013 = vmatprep.subr.mxu0 0.0
        %1014 = vmatpush1.msra.mxu0 0.0
        %1015 = vmatprep.subr.mxu0 0.0
        %1016 = vmatpush1.msra.mxu0 0.0
        %1017 = vmatprep.mubr.f32.mxu0 0.0
        %1018 = vmatmul.mubr.f32.gmra.mrb[0].mxu0 %v933
        %v1019 = vpop.f32.mrb[0].mxu0
        %v1020 = vadd.f32 0.0, %v1019
        %v1021 = vpop.f32.mrb[0].mxu0
        %1022 = vmatprep.mubr.f32.mxu0 0.0
        %1023 = vmatmul.mubr.f32.gmra.mrb[0].mxu0 %v934
        %v1024 = vpop.f32.mrb[0].mxu0
        %v1025 = vadd.f32 0.0, %v1024
        %v1026 = vpop.f32.mrb[0].mxu0
        %1027 = vmatprep.mubr.f32.mxu0 0.0
        %1028 = vmatmul.mubr.f32.gmra.mrb[0].mxu0 %v935
        %v1029 = vpop.f32.mrb[0].mxu0
        %v1030 = vadd.f32 0.0, %v1029
        %v1031 = vpop.f32.mrb[0].mxu0
        %1032 = vdwg.mxu0
        %v1033 = vadd.f32 %v920, %v1020
        %v1034 = vadd.f32 %v925, %v1025
        %v1035 = vadd.f32 %v930, %v1030
        %v1036 = vld [vmem:[%s6] sm:$0x1]
        %v1038 = vlaneseq
        %v1039 = vshrl.u32 %v1038, 7
        %v1040 = vsub.s32 0, %v1039
        %v1041 = vrot.slane %v1036, %v1040
        %v1043 = vmul.f32 %v1033, %v1041
        %v1044 = vmul.f32 %v1034, %v1041
        %v1045 = vmul.f32 %v1035, %v1041
        %v1046 = vld [vmem:[%s7] sm:$0x1]
        %v1048 = vlaneseq
        %v1049 = vshrl.u32 %v1048, 7
        %v1050 = vsub.s32 0, %v1049
        %v1051 = vrot.slane %v1046, %v1050
        %v1053 = vadd.f32 %v1043, %v1051
        %v1054 = vadd.f32 %v1044, %v1051
        %v1055 = vadd.f32 %v1045, %v1051
        %v1056 = vmax.f32 %v1053, 0.0
        %v1057 = vmax.f32 %v1054, 0.0
        %v1058 = vmax.f32 %v1055, 0.0
        %v1059 = vmul.f32 %v1056, %v716
        %v1060 = vmul.f32 %v1057, %v721
        %v1061 = vmul.f32 %v1058, %v726
        %1062 = vst [vmem:[#allocation2 + $0x8] sm:$0xff] %v1059
        %1063 = vst [vmem:[#allocation2 + $0x10] sm:$0xff] %v1060
        %1064 = vst [vmem:[#allocation2 + $0x18] sm:$0xff] %v1061
        %v1065 = vld [vmem:[#allocation2 + $0x7] sm:$0xff]
        %v1066 = vld [vmem:[#allocation2 + $0xf] sm:$0xff]
        %v1067 = vld [vmem:[#allocation2 + $0x17] sm:$0xff]
        %v1068 = vld [vmem:[%s8] sm:$0xff]
        %v1069 = vld [vmem:[%s8 + $0x8] sm:$0xff]
        %v1070 = vld [vmem:[%s8 + $0x10] sm:$0xff]
        %v1071 = vld [vmem:[%s8 + $0x18] sm:$0xff]
        %v1072 = vld [vmem:[%s8 + $0x20] sm:$0xff]
        %v1073 = vld [vmem:[%s8 + $0x28] sm:$0xff]
        %v1074 = vld [vmem:[%s8 + $0x30] sm:$0xff]
        %v1075 = vld [vmem:[%s8 + $0x38] sm:$0xff]
        %v1076 = vld [vmem:[%s8 + $0x40] sm:$0xff]
        %v1077 = vld [vmem:[%s8 + $0x48] sm:$0xff]
        %v1078 = vld [vmem:[%s8 + $0x50] sm:$0xff]
        %v1079 = vld [vmem:[%s8 + $0x58] sm:$0xff]
        %v1080 = vld [vmem:[%s8 + $0x60] sm:$0xff]
        %v1081 = vld [vmem:[%s8 + $0x68] sm:$0xff]
        %v1082 = vld [vmem:[%s8 + $0x70] sm:$0xff]
        %v1083 = vld [vmem:[%s8 + $0x78] sm:$0xff]
        %v1084 = vld [vmem:[#allocation2 + $0x8] sm:$0xff]
        %v1085 = vld [vmem:[#allocation2 + $0x10] sm:$0xff]
        %v1086 = vld [vmem:[#allocation2 + $0x18] sm:$0xff]
        %s1087 = scalar_lea.vmem %s8, 128
        %v1088 = vld [vmem:[%s1087] sm:$0xff]
        %v1089 = vld [vmem:[%s1087 + $0x8] sm:$0xff]
        %v1090 = vld [vmem:[%s1087 + $0x10] sm:$0xff]
        %v1091 = vld [vmem:[%s1087 + $0x18] sm:$0xff]
        %v1092 = vld [vmem:[%s1087 + $0x20] sm:$0xff]
        %v1093 = vld [vmem:[%s1087 + $0x28] sm:$0xff]
        %v1094 = vld [vmem:[%s1087 + $0x30] sm:$0xff]
        %v1095 = vld [vmem:[%s1087 + $0x38] sm:$0xff]
        %v1096 = vld [vmem:[%s1087 + $0x40] sm:$0xff]
        %v1097 = vld [vmem:[%s1087 + $0x48] sm:$0xff]
        %v1098 = vld [vmem:[%s1087 + $0x50] sm:$0xff]
        %v1099 = vld [vmem:[%s1087 + $0x58] sm:$0xff]
        %v1100 = vld [vmem:[%s1087 + $0x60] sm:$0xff]
        %v1101 = vld [vmem:[%s1087 + $0x68] sm:$0xff]
        %v1102 = vld [vmem:[%s1087 + $0x70] sm:$0xff]
        %v1103 = vld [vmem:[%s1087 + $0x78] sm:$0xff]
        %1104 = vmatprep.subr.mxu0 0.0
        %1105 = vmatpush1.msra.mxu0 %v1088
        %1106 = vmatprep.subr.mxu0 0.0
        %1107 = vmatpush1.msra.mxu0 %v1089
        %1108 = vmatprep.subr.mxu0 0.0
        %1109 = vmatpush1.msra.mxu0 %v1090
        %1110 = vmatprep.subr.mxu0 0.0
        %1111 = vmatpush1.msra.mxu0 %v1091
        %1112 = vmatprep.subr.mxu0 0.0
        %1113 = vmatpush1.msra.mxu0 %v1092
        %1114 = vmatprep.subr.mxu0 0.0
        %1115 = vmatpush1.msra.mxu0 %v1093
        %1116 = vmatprep.subr.mxu0 0.0
        %1117 = vmatpush1.msra.mxu0 %v1094
        %1118 = vmatprep.subr.mxu0 0.0
        %1119 = vmatpush1.msra.mxu0 %v1095
        %1120 = vmatprep.subr.mxu0 0.0
        %1121 = vmatpush1.msra.mxu0 %v1096
        %1122 = vmatprep.subr.mxu0 0.0
        %1123 = vmatpush1.msra.mxu0 %v1097
        %1124 = vmatprep.subr.mxu0 0.0
        %1125 = vmatpush1.msra.mxu0 %v1098
        %1126 = vmatprep.subr.mxu0 0.0
        %1127 = vmatpush1.msra.mxu0 %v1099
        %1128 = vmatprep.subr.mxu0 0.0
        %1129 = vmatpush1.msra.mxu0 %v1100
        %1130 = vmatprep.subr.mxu0 0.0
        %1131 = vmatpush1.msra.mxu0 %v1101
        %1132 = vmatprep.subr.mxu0 0.0
        %1133 = vmatpush1.msra.mxu0 %v1102
        %1134 = vmatprep.subr.mxu0 0.0
        %1135 = vmatpush1.msra.mxu0 %v1103
        %1136 = vmatprep.subr.mxu0 0.0
        %1137 = vmatpush1.msra.mxu0 0.0
        %1138 = vmatprep.subr.mxu0 0.0
        %1139 = vmatpush1.msra.mxu0 0.0
        %1140 = vmatprep.subr.mxu0 0.0
        %1141 = vmatpush1.msra.mxu0 0.0
        %1142 = vmatprep.subr.mxu0 0.0
        %1143 = vmatpush1.msra.mxu0 0.0
        %1144 = vmatprep.subr.mxu0 0.0
        %1145 = vmatpush1.msra.mxu0 0.0
        %1146 = vmatprep.subr.mxu0 0.0
        %1147 = vmatpush1.msra.mxu0 0.0
        %1148 = vmatprep.subr.mxu0 0.0
        %1149 = vmatpush1.msra.mxu0 0.0
        %1150 = vmatprep.subr.mxu0 0.0
        %1151 = vmatpush1.msra.mxu0 0.0
        %1152 = vmatprep.subr.mxu0 0.0
        %1153 = vmatpush1.msra.mxu0 0.0
        %1154 = vmatprep.subr.mxu0 0.0
        %1155 = vmatpush1.msra.mxu0 0.0
        %1156 = vmatprep.subr.mxu0 0.0
        %1157 = vmatpush1.msra.mxu0 0.0
        %1158 = vmatprep.subr.mxu0 0.0
        %1159 = vmatpush1.msra.mxu0 0.0
        %1160 = vmatprep.subr.mxu0 0.0
        %1161 = vmatpush1.msra.mxu0 0.0
        %1162 = vmatprep.subr.mxu0 0.0
        %1163 = vmatpush1.msra.mxu0 0.0
        %1164 = vmatprep.subr.mxu0 0.0
        %1165 = vmatpush1.msra.mxu0 0.0
        %1166 = vmatprep.subr.mxu0 0.0
        %1167 = vmatpush1.msra.mxu0 0.0
        %1168 = vmatprep.mubr.f32.mxu0 0.0
        %1169 = vmatmul.mubr.f32.gmra.mrb[0].mxu0 %v1084
        %v1170 = vpop.f32.mrb[0].mxu0
        %v1171 = vadd.f32 0.0, %v1170
        %v1172 = vpop.f32.mrb[0].mxu0
        %1173 = vmatprep.mubr.f32.mxu0 0.0
        %1174 = vmatmul.mubr.f32.gmra.mrb[0].mxu0 %v1085
        %v1175 = vpop.f32.mrb[0].mxu0
        %v1176 = vadd.f32 0.0, %v1175
        %v1177 = vpop.f32.mrb[0].mxu0
        %1178 = vmatprep.mubr.f32.mxu0 0.0
        %1179 = vmatmul.mubr.f32.gmra.mrb[0].mxu0 %v1086
        %v1180 = vpop.f32.mrb[0].mxu0
        %v1181 = vadd.f32 0.0, %v1180
        %v1182 = vpop.f32.mrb[0].mxu0
        %1183 = vdwg.mxu0
        %1184 = vmatprep.subr.mxu0 0.0
        %1185 = vmatpush1.msra.mxu0 %v1068
        %1186 = vmatprep.subr.mxu0 0.0
        %1187 = vmatpush1.msra.mxu0 %v1069
        %1188 = vmatprep.subr.mxu0 0.0
        %1189 = vmatpush1.msra.mxu0 %v1070
        %1190 = vmatprep.subr.mxu0 0.0
        %1191 = vmatpush1.msra.mxu0 %v1071
        %1192 = vmatprep.subr.mxu0 0.0
        %1193 = vmatpush1.msra.mxu0 %v1072
        %1194 = vmatprep.subr.mxu0 0.0
        %1195 = vmatpush1.msra.mxu0 %v1073
        %1196 = vmatprep.subr.mxu0 0.0
        %1197 = vmatpush1.msra.mxu0 %v1074
        %1198 = vmatprep.subr.mxu0 0.0
        %1199 = vmatpush1.msra.mxu0 %v1075
        %1200 = vmatprep.subr.mxu0 0.0
        %1201 = vmatpush1.msra.mxu0 %v1076
        %1202 = vmatprep.subr.mxu0 0.0
        %1203 = vmatpush1.msra.mxu0 %v1077
        %1204 = vmatprep.subr.mxu0 0.0
        %1205 = vmatpush1.msra.mxu0 %v1078
        %1206 = vmatprep.subr.mxu0 0.0
        %1207 = vmatpush1.msra.mxu0 %v1079
        %1208 = vmatprep.subr.mxu0 0.0
        %1209 = vmatpush1.msra.mxu0 %v1080
        %1210 = vmatprep.subr.mxu0 0.0
        %1211 = vmatpush1.msra.mxu0 %v1081
        %1212 = vmatprep.subr.mxu0 0.0
        %1213 = vmatpush1.msra.mxu0 %v1082
        %1214 = vmatprep.subr.mxu0 0.0
        %1215 = vmatpush1.msra.mxu0 %v1083
        %1216 = vmatprep.subr.mxu0 0.0
        %1217 = vmatpush1.msra.mxu0 0.0
        %1218 = vmatprep.subr.mxu0 0.0
        %1219 = vmatpush1.msra.mxu0 0.0
        %1220 = vmatprep.subr.mxu0 0.0
        %1221 = vmatpush1.msra.mxu0 0.0
        %1222 = vmatprep.subr.mxu0 0.0
        %1223 = vmatpush1.msra.mxu0 0.0
        %1224 = vmatprep.subr.mxu0 0.0
        %1225 = vmatpush1.msra.mxu0 0.0
        %1226 = vmatprep.subr.mxu0 0.0
        %1227 = vmatpush1.msra.mxu0 0.0
        %1228 = vmatprep.subr.mxu0 0.0
        %1229 = vmatpush1.msra.mxu0 0.0
        %1230 = vmatprep.subr.mxu0 0.0
        %1231 = vmatpush1.msra.mxu0 0.0
        %1232 = vmatprep.subr.mxu0 0.0
        %1233 = vmatpush1.msra.mxu0 0.0
        %1234 = vmatprep.subr.mxu0 0.0
        %1235 = vmatpush1.msra.mxu0 0.0
        %1236 = vmatprep.subr.mxu0 0.0
        %1237 = vmatpush1.msra.mxu0 0.0
        %1238 = vmatprep.subr.mxu0 0.0
        %1239 = vmatpush1.msra.mxu0 0.0
        %1240 = vmatprep.subr.mxu0 0.0
        %1241 = vmatpush1.msra.mxu0 0.0
        %1242 = vmatprep.subr.mxu0 0.0
        %1243 = vmatpush1.msra.mxu0 0.0
        %1244 = vmatprep.subr.mxu0 0.0
        %1245 = vmatpush1.msra.mxu0 0.0
        %1246 = vmatprep.subr.mxu0 0.0
        %1247 = vmatpush1.msra.mxu0 0.0
        %1248 = vmatprep.mubr.f32.mxu0 0.0
        %1249 = vmatmul.mubr.f32.gmra.mrb[0].mxu0 %v1065
        %v1250 = vpop.f32.mrb[0].mxu0
        %v1251 = vadd.f32 %v1171, %v1250
        %v1252 = vpop.f32.mrb[0].mxu0
        %1253 = vmatprep.mubr.f32.mxu0 0.0
        %1254 = vmatmul.mubr.f32.gmra.mrb[0].mxu0 %v1066
        %v1255 = vpop.f32.mrb[0].mxu0
        %v1256 = vadd.f32 %v1176, %v1255
        %v1257 = vpop.f32.mrb[0].mxu0
        %1258 = vmatprep.mubr.f32.mxu0 0.0
        %1259 = vmatmul.mubr.f32.gmra.mrb[0].mxu0 %v1067
        %v1260 = vpop.f32.mrb[0].mxu0
        %v1261 = vadd.f32 %v1181, %v1260
        %v1262 = vpop.f32.mrb[0].mxu0
        %1263 = vdwg.mxu0
        %v1264 = vld [vmem:[#allocation2 + $0x9] sm:$0xff]
        %v1265 = vld [vmem:[#allocation2 + $0x11] sm:$0xff]
        %v1266 = vld [vmem:[#allocation2 + $0x19] sm:$0xff]
        %s1267 = scalar_lea.vmem %s8, 256
        %v1268 = vld [vmem:[%s1267] sm:$0xff]
        %v1269 = vld [vmem:[%s1267 + $0x8] sm:$0xff]
        %v1270 = vld [vmem:[%s1267 + $0x10] sm:$0xff]
        %v1271 = vld [vmem:[%s1267 + $0x18] sm:$0xff]
        %v1272 = vld [vmem:[%s1267 + $0x20] sm:$0xff]
        %v1273 = vld [vmem:[%s1267 + $0x28] sm:$0xff]
        %v1274 = vld [vmem:[%s1267 + $0x30] sm:$0xff]
        %v1275 = vld [vmem:[%s1267 + $0x38] sm:$0xff]
        %v1276 = vld [vmem:[%s1267 + $0x40] sm:$0xff]
        %v1277 = vld [vmem:[%s1267 + $0x48] sm:$0xff]
        %v1278 = vld [vmem:[%s1267 + $0x50] sm:$0xff]
        %v1279 = vld [vmem:[%s1267 + $0x58] sm:$0xff]
        %v1280 = vld [vmem:[%s1267 + $0x60] sm:$0xff]
        %v1281 = vld [vmem:[%s1267 + $0x68] sm:$0xff]
        %v1282 = vld [vmem:[%s1267 + $0x70] sm:$0xff]
        %v1283 = vld [vmem:[%s1267 + $0x78] sm:$0xff]
        %1284 = vmatprep.subr.mxu0 0.0
        %1285 = vmatpush1.msra.mxu0 %v1268
        %1286 = vmatprep.subr.mxu0 0.0
        %1287 = vmatpush1.msra.mxu0 %v1269
        %1288 = vmatprep.subr.mxu0 0.0
        %1289 = vmatpush1.msra.mxu0 %v1270
        %1290 = vmatprep.subr.mxu0 0.0
        %1291 = vmatpush1.msra.mxu0 %v1271
        %1292 = vmatprep.subr.mxu0 0.0
        %1293 = vmatpush1.msra.mxu0 %v1272
        %1294 = vmatprep.subr.mxu0 0.0
        %1295 = vmatpush1.msra.mxu0 %v1273
        %1296 = vmatprep.subr.mxu0 0.0
        %1297 = vmatpush1.msra.mxu0 %v1274
        %1298 = vmatprep.subr.mxu0 0.0
        %1299 = vmatpush1.msra.mxu0 %v1275
        %1300 = vmatprep.subr.mxu0 0.0
        %1301 = vmatpush1.msra.mxu0 %v1276
        %1302 = vmatprep.subr.mxu0 0.0
        %1303 = vmatpush1.msra.mxu0 %v1277
        %1304 = vmatprep.subr.mxu0 0.0
        %1305 = vmatpush1.msra.mxu0 %v1278
        %1306 = vmatprep.subr.mxu0 0.0
        %1307 = vmatpush1.msra.mxu0 %v1279
        %1308 = vmatprep.subr.mxu0 0.0
        %1309 = vmatpush1.msra.mxu0 %v1280
        %1310 = vmatprep.subr.mxu0 0.0
        %1311 = vmatpush1.msra.mxu0 %v1281
        %1312 = vmatprep.subr.mxu0 0.0
        %1313 = vmatpush1.msra.mxu0 %v1282
        %1314 = vmatprep.subr.mxu0 0.0
        %1315 = vmatpush1.msra.mxu0 %v1283
        %1316 = vmatprep.subr.mxu0 0.0
        %1317 = vmatpush1.msra.mxu0 0.0
        %1318 = vmatprep.subr.mxu0 0.0
        %1319 = vmatpush1.msra.mxu0 0.0
        %1320 = vmatprep.subr.mxu0 0.0
        %1321 = vmatpush1.msra.mxu0 0.0
        %1322 = vmatprep.subr.mxu0 0.0
        %1323 = vmatpush1.msra.mxu0 0.0
        %1324 = vmatprep.subr.mxu0 0.0
        %1325 = vmatpush1.msra.mxu0 0.0
        %1326 = vmatprep.subr.mxu0 0.0
        %1327 = vmatpush1.msra.mxu0 0.0
        %1328 = vmatprep.subr.mxu0 0.0
        %1329 = vmatpush1.msra.mxu0 0.0
        %1330 = vmatprep.subr.mxu0 0.0
        %1331 = vmatpush1.msra.mxu0 0.0
        %1332 = vmatprep.subr.mxu0 0.0
        %1333 = vmatpush1.msra.mxu0 0.0
        %1334 = vmatprep.subr.mxu0 0.0
        %1335 = vmatpush1.msra.mxu0 0.0
        %1336 = vmatprep.subr.mxu0 0.0
        %1337 = vmatpush1.msra.mxu0 0.0
        %1338 = vmatprep.subr.mxu0 0.0
        %1339 = vmatpush1.msra.mxu0 0.0
        %1340 = vmatprep.subr.mxu0 0.0
        %1341 = vmatpush1.msra.mxu0 0.0
        %1342 = vmatprep.subr.mxu0 0.0
        %1343 = vmatpush1.msra.mxu0 0.0
        %1344 = vmatprep.subr.mxu0 0.0
        %1345 = vmatpush1.msra.mxu0 0.0
        %1346 = vmatprep.subr.mxu0 0.0
        %1347 = vmatpush1.msra.mxu0 0.0
        %1348 = vmatprep.mubr.f32.mxu0 0.0
        %1349 = vmatmul.mubr.f32.gmra.mrb[0].mxu0 %v1264
        %v1350 = vpop.f32.mrb[0].mxu0
        %v1351 = vadd.f32 0.0, %v1350
        %v1352 = vpop.f32.mrb[0].mxu0
        %1353 = vmatprep.mubr.f32.mxu0 0.0
        %1354 = vmatmul.mubr.f32.gmra.mrb[0].mxu0 %v1265
        %v1355 = vpop.f32.mrb[0].mxu0
        %v1356 = vadd.f32 0.0, %v1355
        %v1357 = vpop.f32.mrb[0].mxu0
        %1358 = vmatprep.mubr.f32.mxu0 0.0
        %1359 = vmatmul.mubr.f32.gmra.mrb[0].mxu0 %v1266
        %v1360 = vpop.f32.mrb[0].mxu0
        %v1361 = vadd.f32 0.0, %v1360
        %v1362 = vpop.f32.mrb[0].mxu0
        %1363 = vdwg.mxu0
        %v1364 = vadd.f32 %v1251, %v1351
        %v1365 = vadd.f32 %v1256, %v1356
        %v1366 = vadd.f32 %v1261, %v1361
        %v1367 = vld [vmem:[%s9] sm:$0x1]
        %v1369 = vlaneseq
        %v1370 = vshrl.u32 %v1369, 7
        %v1371 = vsub.s32 0, %v1370
        %v1372 = vrot.slane %v1367, %v1371
        %v1374 = vmul.f32 %v1364, %v1372
        %v1375 = vmul.f32 %v1365, %v1372
        %v1376 = vmul.f32 %v1366, %v1372
        %v1377 = vld [vmem:[%s10] sm:$0x1]
        %v1379 = vlaneseq
        %v1380 = vshrl.u32 %v1379, 7
        %v1381 = vsub.s32 0, %v1380
        %v1382 = vrot.slane %v1377, %v1381
        %v1384 = vadd.f32 %v1374, %v1382
        %v1385 = vadd.f32 %v1375, %v1382
        %v1386 = vadd.f32 %v1376, %v1382
        %v1387 = vmax.f32 %v1384, 0.0
        %v1388 = vmax.f32 %v1385, 0.0
        %v1389 = vmax.f32 %v1386, 0.0
        %v1390 = vmul.f32 %v1387, %v716
        %v1391 = vmul.f32 %v1388, %v721
        %v1392 = vmul.f32 %v1389, %v726
        %v1393 = vmax.f32 %v1390, %v1391
        %v1394 = vmax.f32 %v1393, %v1392
        %v1395 = vrot.slane %v1394, 4
        %v1396 = vmax.f32 %v1394, %v1395
        %v1397 = vrot.slane %v1396, 2
        %v1398 = vmax.f32 %v1396, %v1397
        %v1399 = vrot.slane %v1398, 1
        %v1400 = vmax.f32 %v1398, %v1399
        %1401 = vst [vmem:[%s378] sm:$0x1] %v1400
        %s1402 = sand.u32 %s269, 1
        %s1403 = scalar_lea.sflag [#allocation4], %s1402
        %s1404 = sand.u32 %s269, 1
        %s1405 = scalar_lea.vmem [#allocation3], %s1404
        // Predicated region
        $region65: #{stack_cnn_forward.1} parent=63 // pred_check
          %p1406 = pneg %p279
        $region66: #{stack_cnn_forward.1} parent=63 // pred_check_branch
          %1408 = sbr.rel (%p1406) target = $region68
        $region67: #{stack_cnn_forward.1} parent=63 // pred_region
          %s1410 = ssub.s32 16, 16
          %1411 = vsyncadd %s1403, %s1410
          %s1412 = smul.addr %s25, 16
          %s1413 = scalar_lea.hbm %s11, %s1412
          %s1415 = sshll.u32 %s1405, 4
          %s1416 = int_to_ptr.vmem [resolvable:$true] %s1415
          %1418 = dma.vmem_to_hbm [thread:$0]  %s1416, 16, %s1413, %s1403
        $region68: #{stack_cnn_forward.1} parent=63 // pred_fallthru
          _
      $region64: #{stack_cnn_forward.1} parent=5 // pred_fallthru
        _
      %p1419 = scmp.le.s32.totalorder 2, %s20
      // Predicated region
      $region69: #{stack_cnn_forward.1} parent=5 // pred_check
        %p1420 = pneg %p1419
      $region70: #{stack_cnn_forward.1} parent=5 // pred_check_branch
        %1422 = sbr.rel (%p1420) target = $region72
      $region71: #{stack_cnn_forward.1} parent=5 // pred_region
        %s1423 = ssub.s32 %s20, 2
        // Predicated region
        $region73: #{stack_cnn_forward.1} parent=71 // pred_check
          %p1424 = pneg %p285
        $region74: #{stack_cnn_forward.1} parent=71 // pred_check_branch
          %1426 = sbr.rel (%p1424) target = $region76
        $region75: #{stack_cnn_forward.1} parent=71 // pred_region
          %s1427 = sand.u32 %s270, 1
          %s1428 = scalar_lea.sflag [#allocation4], %s1427
          %s1429 = sand.u32 %s270, 1
          %s1430 = scalar_lea.vmem [#allocation3], %s1429
          %1431 = dma.done %s1428, 16
        $region76: #{stack_cnn_forward.1} parent=71 // pred_fallthru
          _
      $region72: #{stack_cnn_forward.1} parent=5 // pred_fallthru
        _
    $region6: #{stack_cnn_forward.1} parent=1 // loop_footer
      %s24 = sadd.s32 1, %s20
    $region7: #{stack_cnn_forward.1} parent=1 // loop_footer_branch
      %19 = sbr.rel target = $region3
    $region8: #{stack_cnn_forward.1} parent=1 // loop_exit
      _
    %1432 = vsyncpa [#allocation4], 1
    %s1433 = scalar_lea.sflag [#allocation4], 1
    %1434 = vsyncpa %s1433, 1

</llo_original>
